<compile_context>
chip_gen: v5e
topology: v5e:2x2
jax: 0.10.0
libtpu: 0.0.40
codegen_flags: <defaults>
</compile_context>

<pallas_src>
import functools

import jax
import jax.numpy as jnp
from jax.experimental import pallas as pl
from jax.experimental.pallas import tpu as pltpu


def _round_up(x, m):
    return ((x + m - 1) // m) * m


def _pad_to(a, shape):
    return jnp.pad(a, [(0, s - d) for d, s in zip(a.shape, shape)])


def _mlp_kernel(x_ref, w1_ref, b1_ref, w2_ref, b2_ref, w3_ref, b3_ref, o_ref):
    # Fused 3-layer MLP on one batch tile. f32 x is converted to bf16 in one
    # whole-tile pass (hidden under the DMA); bf16 MXU operands, f32
    # accumulation, f32 bias/ReLU math (v5e-safe).
    x = x_ref[...].astype(jnp.bfloat16)                                   # (tm, n_in)
    h = jnp.dot(x, w1_ref[...], preferred_element_type=jnp.float32) + b1_ref[...]
    h = jnp.maximum(h, 0.0).astype(jnp.bfloat16)
    # hidden2 applied twice, exactly like the PyTorch forward
    h = jnp.dot(h, w2_ref[...], preferred_element_type=jnp.float32) + b2_ref[...]
    h = jnp.maximum(h, 0.0).astype(jnp.bfloat16)
    h = jnp.dot(h, w2_ref[...], preferred_element_type=jnp.float32) + b2_ref[...]
    h = jnp.maximum(h, 0.0).astype(jnp.bfloat16)
    # out(h) (no activation); lane-dense 128-wide store
    o_ref[...] = (jnp.dot(h, w3_ref[...], preferred_element_type=jnp.float32)
                  + b3_ref[...]).astype(o_ref.dtype)


def _prepare_params(params, lane=128):
    """Zero-pad hidden/output dims to 128 lanes; bf16 weights, f32 biases."""
    w1, b1, w2, b2, w3, b3 = params
    # Robustness: accept (n,) biases (PyTorch state_dict layout) as well as (1, n).
    b1, b2, b3 = (b.reshape(1, -1) if b.ndim == 1 else b for b in (b1, b2, b3))
    n_in = w1.shape[0]
    hp = _round_up(w1.shape[1], lane)      # 75  -> 128
    op = _round_up(w3.shape[1], lane)      # 10  -> 128
    w1p = _pad_to(w1, (n_in, hp)).astype(jnp.bfloat16)
    b1p = _pad_to(b1, (1, hp)).astype(jnp.float32)
    w2p = _pad_to(w2, (hp, hp)).astype(jnp.bfloat16)
    b2p = _pad_to(b2, (1, hp)).astype(jnp.float32)
    w3p = _pad_to(w3, (hp, op)).astype(jnp.bfloat16)
    b3p = _pad_to(b3, (1, op)).astype(jnp.float32)
    return (w1p, b1p, w2p, b2p, w3p, b3p)


def _choose_tile(b, block_batch):
    # >= 2 grid steps when batch allows (v7x dual-TC), 16-row granularity,
    # capped at block_batch rows (512 f32 rows = 6 MiB x block, 12 MiB dbl-buf).
    tm = _round_up(max(1, -(-b // 2)), 16)
    return min(tm, block_batch)


@functools.partial(jax.jit, static_argnames=("block_batch",))
def linear_classifier_forward(x_nchw, params, *, block_batch=512):
    """Forward pass of LinearClassifier. x_nchw: (B, C, H, W) float32."""
    b = x_nchw.shape[0]
    n_out = params[5].shape[1] if params[5].ndim == 2 else params[5].shape[0]

    w1, b1, w2, b2, w3, b3 = _prepare_params(params)
    n_in = w1.shape[0]
    hdim = w1.shape[1]                               # 128
    odim = w3.shape[1]                               # 128

    tm = _choose_tile(b, block_batch)
    grid = (pl.cdiv(b, tm),)                         # ragged last block masked by Pallas

    x_flat = x_nchw.reshape(b, -1)                   # == x.view(B, -1), stays f32

    flops = 2 * b * (n_in * hdim + 2 * hdim * hdim + hdim * odim)
    bytes_accessed = (
        x_flat.size * 4                              # f32 x read
        + (w1.size + w2.size + w3.size) * 2          # bf16 weights
        + (b1.size + b2.size + b3.size) * 4          # f32 biases
        + b * odim * 4                               # f32 out write
    )

    resident = functools.partial(pl.BlockSpec, pipeline_mode=pl.Buffered(1))

    out = pl.pallas_call(
        _mlp_kernel,
        out_shape=jax.ShapeDtypeStruct((b, odim), jnp.float32),
        grid=grid,
        in_specs=[
            pl.BlockSpec((tm, n_in), lambda i: (i, 0)),       # x: batch-tiled, f32
            resident((n_in, hdim), lambda i: (0, 0)),          # w1: resident, 1-buf
            resident((1, hdim), lambda i: (0, 0)),             # b1
            resident((hdim, hdim), lambda i: (0, 0)),          # w2
            resident((1, hdim), lambda i: (0, 0)),             # b2
            resident((hdim, odim), lambda i: (0, 0)),          # w3
            resident((1, odim), lambda i: (0, 0)),             # b3
        ],
        out_specs=pl.BlockSpec((tm, odim), lambda i: (i, 0)),
        compiler_params=pltpu.CompilerParams(
            dimension_semantics=("parallel",),
            vmem_limit_bytes=48 * 1024 * 1024,
        ),
        cost_estimate=pl.CostEstimate(
            flops=flops, transcendentals=0, bytes_accessed=bytes_accessed),
    )(x_flat, w1, b1, w2, b2, w3, b3)

    return out[:, :n_out]


def init_params(key, n_input, n_hidden, n_output):
    """Deterministic init mimicking torch.nn.Linear default (U(-1/sqrt(fan_in), +))."""
    def linear(key, fan_in, fan_out):
        kw, kb = jax.random.split(key)
        bound = 1.0 / jnp.sqrt(fan_in)
        w = jax.random.uniform(kw, (fan_in, fan_out), jnp.float32, -bound, bound)
        bias = jax.random.uniform(kb, (1, fan_out), jnp.float32, -bound, bound)
        return w, bias

    k1, k2, k3, _k_fc = jax.random.split(key, 4)
    w1, b1 = linear(k1, n_input, n_hidden)   # self.hidden
    w2, b2 = linear(k2, n_hidden, n_hidden)  # self.hidden2
    w3, b3 = linear(k3, n_hidden, n_output)  # self.out
    # TODO(synk): self.fc is defined in __init__ but never used in forward; omitted.
    return (w1, b1, w2, b2, w3, b3)


def reference_forward_f32(x_nchw, params):
    """Pure-f32 reference (PyTorch semantics)."""
    w1, b1, w2, b2, w3, b3 = params
    x = x_nchw.reshape(x_nchw.shape[0], -1)
    h = jax.nn.relu(x @ w1 + b1)
    h = jax.nn.relu(h @ w2 + b2)
    h = jax.nn.relu(h @ w2 + b2)
    return h @ w3 + b3


def reference_forward_bf16(x_nchw, params):
    """Reference mirroring the kernel's bf16 operands / f32 accumulation."""
    w1, b1, w2, b2, w3, b3 = params
    bf = jnp.bfloat16
    x = x_nchw.reshape(x_nchw.shape[0], -1).astype(bf)
    h = jnp.dot(x, w1.astype(bf), preferred_element_type=jnp.float32) + b1
    h = jnp.maximum(h, 0.0).astype(bf)
    h = jnp.dot(h, w2.astype(bf), preferred_element_type=jnp.float32) + b2
    h = jnp.maximum(h, 0.0).astype(bf)
    h = jnp.dot(h, w2.astype(bf), preferred_element_type=jnp.float32) + b2
    h = jnp.maximum(h, 0.0).astype(bf)
    return jnp.dot(h, w3.astype(bf), preferred_element_type=jnp.float32) + b3


if __name__ == "__main__":
    key = jax.random.PRNGKey(0)
    k_x, k_p = jax.random.split(key)

    batch, C, H, W = 2, 3, 32, 32             # default input_shape=(32, 32, 3)
    n_input = C * H * W                        # 3072
    n_hidden, n_output = 75, 10

    x = jax.random.normal(k_x, (batch, C, H, W), jnp.float32)
    params = init_params(k_p, n_input, n_hidden, n_output)

    out = linear_classifier_forward(x, params)
    out = jax.block_until_ready(out)

    assert out.shape == (batch, n_output)
    # Tight check vs a reference using the same bf16 operands / f32 accumulation.
    ref_bf16 = reference_forward_bf16(x, params)
    assert jnp.allclose(out, ref_bf16, atol=1e-2, rtol=1e-2), "mismatch vs bf16 reference"
    # Loose semantic check vs the full-f32 PyTorch-equivalent forward.
    ref_f32 = reference_forward_f32(x, params)
    assert jnp.allclose(out, ref_f32, atol=8e-2, rtol=8e-2), "mismatch vs f32 reference"

    print("KERNEL_OK")
</pallas_src>

<mosaic_0001>
module attributes {stable_mosaic.version = 11 : i64} {
  func.func @_mlp_kernel(%arg0: i32, %arg1: memref<16x3072xf32, #tpu.memory_space<vmem>>, %arg2: memref<3072x128xbf16, #tpu.memory_space<vmem>>, %arg3: memref<1x128xf32, #tpu.memory_space<vmem>>, %arg4: memref<128x128xbf16, #tpu.memory_space<vmem>>, %arg5: memref<1x128xf32, #tpu.memory_space<vmem>>, %arg6: memref<128x128xbf16, #tpu.memory_space<vmem>>, %arg7: memref<1x128xf32, #tpu.memory_space<vmem>>, %arg8: memref<16x128xf32, #tpu.memory_space<vmem>>) attributes {dimension_semantics = [#tpu.dimension_semantics<parallel>], iteration_bounds = array<i64: 1>, scalar_prefetch = 0 : i64, scratch_operands = 0 : i64, tpu.core_type = #tpu.core_type<tc>, window_params = [{transform_indices = @transform_0, window_bounds = array<i64: 16, 3072>}, {pipeline_mode = #tpu.pipeline_mode<synchronous>, transform_indices = @transform_1, window_bounds = array<i64: 3072, 128>}, {pipeline_mode = #tpu.pipeline_mode<synchronous>, transform_indices = @transform_2, window_bounds = array<i64: 1, 128>}, {pipeline_mode = #tpu.pipeline_mode<synchronous>, transform_indices = @transform_3, window_bounds = array<i64: 128, 128>}, {pipeline_mode = #tpu.pipeline_mode<synchronous>, transform_indices = @transform_4, window_bounds = array<i64: 1, 128>}, {pipeline_mode = #tpu.pipeline_mode<synchronous>, transform_indices = @transform_5, window_bounds = array<i64: 128, 128>}, {pipeline_mode = #tpu.pipeline_mode<synchronous>, transform_indices = @transform_6, window_bounds = array<i64: 1, 128>}, {transform_indices = @transform_7, window_bounds = array<i64: 16, 128>}]} {
    %c0 = arith.constant 0 : index
    %c0_0 = arith.constant 0 : index
    %0 = vector.load %arg1[%c0, %c0_0] : memref<16x3072xf32, #tpu.memory_space<vmem>>, vector<16x3072xf32>
    %1 = arith.truncf %0 : vector<16x3072xf32> to vector<16x3072xbf16>
    %c0_1 = arith.constant 0 : index
    %c0_2 = arith.constant 0 : index
    %2 = vector.load %arg2[%c0_1, %c0_2] : memref<3072x128xbf16, #tpu.memory_space<vmem>>, vector<3072x128xbf16>
    %cst = arith.constant dense<0.000000e+00> : vector<16x128xf32>
    %3 = tpu.matmul %1, %2, %cst {dimension_numbers = #tpu.dot_dimension_numbers<[1], [0], [0], [1], [0, 0, 1, 1], [], []>} : vector<16x3072xbf16>, vector<3072x128xbf16>, vector<16x128xf32> -> vector<16x128xf32>
    %c0_3 = arith.constant 0 : index
    %c0_4 = arith.constant 0 : index
    %4 = vector.load %arg3[%c0_3, %c0_4] : memref<1x128xf32, #tpu.memory_space<vmem>>, vector<1x128xf32>
    %5 = vector.broadcast %4 : vector<1x128xf32> to vector<16x128xf32>
    %6 = arith.addf %3, %5 : vector<16x128xf32>
    %cst_5 = arith.constant 0.000000e+00 : f32
    %7 = vector.broadcast %cst_5 : f32 to vector<16x128xf32>
    %8 = arith.maximumf %6, %7 : vector<16x128xf32>
    %9 = arith.truncf %8 : vector<16x128xf32> to vector<16x128xbf16>
    %c0_6 = arith.constant 0 : index
    %c0_7 = arith.constant 0 : index
    %10 = vector.load %arg4[%c0_6, %c0_7] : memref<128x128xbf16, #tpu.memory_space<vmem>>, vector<128x128xbf16>
    %cst_8 = arith.constant dense<0.000000e+00> : vector<16x128xf32>
    %11 = tpu.matmul %9, %10, %cst_8 {dimension_numbers = #tpu.dot_dimension_numbers<[1], [0], [0], [1], [0, 0, 1, 1], [], []>} : vector<16x128xbf16>, vector<128x128xbf16>, vector<16x128xf32> -> vector<16x128xf32>
    %c0_9 = arith.constant 0 : index
    %c0_10 = arith.constant 0 : index
    %12 = vector.load %arg5[%c0_9, %c0_10] : memref<1x128xf32, #tpu.memory_space<vmem>>, vector<1x128xf32>
    %13 = vector.broadcast %12 : vector<1x128xf32> to vector<16x128xf32>
    %14 = arith.addf %11, %13 : vector<16x128xf32>
    %cst_11 = arith.constant 0.000000e+00 : f32
    %15 = vector.broadcast %cst_11 : f32 to vector<16x128xf32>
    %16 = arith.maximumf %14, %15 : vector<16x128xf32>
    %17 = arith.truncf %16 : vector<16x128xf32> to vector<16x128xbf16>
    %c0_12 = arith.constant 0 : index
    %c0_13 = arith.constant 0 : index
    %18 = vector.load %arg4[%c0_12, %c0_13] : memref<128x128xbf16, #tpu.memory_space<vmem>>, vector<128x128xbf16>
    %cst_14 = arith.constant dense<0.000000e+00> : vector<16x128xf32>
    %19 = tpu.matmul %17, %18, %cst_14 {dimension_numbers = #tpu.dot_dimension_numbers<[1], [0], [0], [1], [0, 0, 1, 1], [], []>} : vector<16x128xbf16>, vector<128x128xbf16>, vector<16x128xf32> -> vector<16x128xf32>
    %c0_15 = arith.constant 0 : index
    %c0_16 = arith.constant 0 : index
    %20 = vector.load %arg5[%c0_15, %c0_16] : memref<1x128xf32, #tpu.memory_space<vmem>>, vector<1x128xf32>
    %21 = vector.broadcast %20 : vector<1x128xf32> to vector<16x128xf32>
    %22 = arith.addf %19, %21 : vector<16x128xf32>
    %cst_17 = arith.constant 0.000000e+00 : f32
    %23 = vector.broadcast %cst_17 : f32 to vector<16x128xf32>
    %24 = arith.maximumf %22, %23 : vector<16x128xf32>
    %25 = arith.truncf %24 : vector<16x128xf32> to vector<16x128xbf16>
    %c0_18 = arith.constant 0 : index
    %c0_19 = arith.constant 0 : index
    %26 = vector.load %arg6[%c0_18, %c0_19] : memref<128x128xbf16, #tpu.memory_space<vmem>>, vector<128x128xbf16>
    %cst_20 = arith.constant dense<0.000000e+00> : vector<16x128xf32>
    %27 = tpu.matmul %25, %26, %cst_20 {dimension_numbers = #tpu.dot_dimension_numbers<[1], [0], [0], [1], [0, 0, 1, 1], [], []>} : vector<16x128xbf16>, vector<128x128xbf16>, vector<16x128xf32> -> vector<16x128xf32>
    %c0_21 = arith.constant 0 : index
    %c0_22 = arith.constant 0 : index
    %28 = vector.load %arg7[%c0_21, %c0_22] : memref<1x128xf32, #tpu.memory_space<vmem>>, vector<1x128xf32>
    %29 = vector.broadcast %28 : vector<1x128xf32> to vector<16x128xf32>
    %30 = arith.addf %27, %29 : vector<16x128xf32>
    %c0_23 = arith.constant 0 : index
    %c0_24 = arith.constant 0 : index
    %31 = vector.load %arg8[%c0_23, %c0_24] : memref<16x128xf32, #tpu.memory_space<vmem>>, vector<16x128xf32>
    tpu.vector_store %arg8[%c0_23, %c0_24], %30 {strides = array<i32>} : memref<16x128xf32, #tpu.memory_space<vmem>>, vector<16x128xf32>,
    return
  }
  func.func @transform_0(%arg0: i32) -> (i32, i32) {
    %c0_i32 = arith.constant 0 : i32
    %c0_i32_0 = arith.constant 0 : i32
    return %arg0, %c0_i32 : i32, i32
  }
  func.func @transform_1(%arg0: i32) -> (i32, i32) {
    %c0_i32 = arith.constant 0 : i32
    %c0_i32_0 = arith.constant 0 : i32
    %c0_i32_1 = arith.constant 0 : i32
    return %c0_i32, %c0_i32_0 : i32, i32
  }
  func.func @transform_2(%arg0: i32) -> (i32, i32) {
    %c0_i32 = arith.constant 0 : i32
    %c0_i32_0 = arith.constant 0 : i32
    %c0_i32_1 = arith.constant 0 : i32
    return %c0_i32, %c0_i32_0 : i32, i32
  }
  func.func @transform_3(%arg0: i32) -> (i32, i32) {
    %c0_i32 = arith.constant 0 : i32
    %c0_i32_0 = arith.constant 0 : i32
    %c0_i32_1 = arith.constant 0 : i32
    return %c0_i32, %c0_i32_0 : i32, i32
  }
  func.func @transform_4(%arg0: i32) -> (i32, i32) {
    %c0_i32 = arith.constant 0 : i32
    %c0_i32_0 = arith.constant 0 : i32
    %c0_i32_1 = arith.constant 0 : i32
    return %c0_i32, %c0_i32_0 : i32, i32
  }
  func.func @transform_5(%arg0: i32) -> (i32, i32) {
    %c0_i32 = arith.constant 0 : i32
    %c0_i32_0 = arith.constant 0 : i32
    %c0_i32_1 = arith.constant 0 : i32
    return %c0_i32, %c0_i32_0 : i32, i32
  }
  func.func @transform_6(%arg0: i32) -> (i32, i32) {
    %c0_i32 = arith.constant 0 : i32
    %c0_i32_0 = arith.constant 0 : i32
    %c0_i32_1 = arith.constant 0 : i32
    return %c0_i32, %c0_i32_0 : i32, i32
  }
  func.func @transform_7(%arg0: i32) -> (i32, i32) {
    %c0_i32 = arith.constant 0 : i32
    %c0_i32_0 = arith.constant 0 : i32
    return %arg0, %c0_i32 : i32, i32
  }
}

</mosaic_0001>

<llo_original>
// kernel: linear_classifier_forward.1
$region0: #{linear_classifier_forward.1}
  #allocation0 [shape = 'u32[]', space=smem, size = 0x4, offset = 0x4, fixed_abs, tag = 'smem constant byte address 0x4 - core index']
  #allocation1 [shape = 'u32[72,128]{1,0:T(1,128)}', space=vmem, size = 0x9000, scoped, tag = 'internal scratch']
  %s0 = inlined_call_operand.vmem [shape: f32[2,3072], index: 0, kind: input, shape index: {}]
  %s1 = inlined_call_operand.vmem [shape: bf16[3072,128], index: 1, kind: input, shape index: {}]
  %s2 = inlined_call_operand.vmem [shape: f32[1,128], index: 2, kind: input, shape index: {}]
  %s3 = inlined_call_operand.vmem [shape: bf16[128,128], index: 3, kind: input, shape index: {}]
  %s4 = inlined_call_operand.vmem [shape: f32[1,128], index: 4, kind: input, shape index: {}]
  %s5 = inlined_call_operand.vmem [shape: bf16[128,128], index: 5, kind: input, shape index: {}]
  %s6 = inlined_call_operand.vmem [shape: f32[1,128], index: 6, kind: input, shape index: {}]
  %s7 = inlined_call_operand.hbm [shape: f32[2,128], index: 7, kind: output, shape index: {}]
  %s8 = sld [smem:[#allocation0]]
  $region38: #{linear_classifier_forward.1} parent=0
    _
  %s10 = ssub.s32 1, %s8
  %s11 = scalar_select 0, %s10, %s8
  $region1: #{linear_classifier_forward.1} parent=0
    #allocation2 [shape = 'u8[8192]{0}', space=vmem, size = 0x2000, scoped, tag = 'output window, operand 0, single buffered']
    #allocation3 [shape = 's32[1]{0}', space=sflag, size = 0x4, scoped, tag = 'scoped memory for linear_classifier_forward.1']
    %12 = vsyncpa [#allocation3], 0
    // Predicated region
    $region2: #{linear_classifier_forward.1} parent=1 // pred_check
      _
    $region3: #{linear_classifier_forward.1} parent=1 // pred_check_branch
      %14 = sbr.rel (0) target = $region5
    $region4: #{linear_classifier_forward.1} parent=1 // pred_region
      _
    $region5: #{linear_classifier_forward.1} parent=1 // pred_fallthru
      _
    // Predicated region
    $region6: #{linear_classifier_forward.1} parent=1 // pred_check
      _
    $region7: #{linear_classifier_forward.1} parent=1 // pred_check_branch
      %16 = sbr.rel (0) target = $region9
    $region8: #{linear_classifier_forward.1} parent=1 // pred_region
      _
    $region9: #{linear_classifier_forward.1} parent=1 // pred_fallthru
      _
    // Predicated region
    $region10: #{linear_classifier_forward.1} parent=1 // pred_check
      _
    $region11: #{linear_classifier_forward.1} parent=1 // pred_check_branch
      %18 = sbr.rel (0) target = $region13
    $region12: #{linear_classifier_forward.1} parent=1 // pred_region
      _
    $region13: #{linear_classifier_forward.1} parent=1 // pred_fallthru
      _
    // Predicated region
    $region14: #{linear_classifier_forward.1} parent=1 // pred_check
      _
    $region15: #{linear_classifier_forward.1} parent=1 // pred_check_branch
      %20 = sbr.rel (0) target = $region17
    $region16: #{linear_classifier_forward.1} parent=1 // pred_region
      _
    $region17: #{linear_classifier_forward.1} parent=1 // pred_fallthru
      _
    // Predicated region
    $region18: #{linear_classifier_forward.1} parent=1 // pred_check
      _
    $region19: #{linear_classifier_forward.1} parent=1 // pred_check_branch
      %22 = sbr.rel (0) target = $region21
    $region20: #{linear_classifier_forward.1} parent=1 // pred_region
      _
    $region21: #{linear_classifier_forward.1} parent=1 // pred_fallthru
      _
    // Predicated region
    $region22: #{linear_classifier_forward.1} parent=1 // pred_check
      _
    $region23: #{linear_classifier_forward.1} parent=1 // pred_check_branch
      %24 = sbr.rel (0) target = $region25
    $region24: #{linear_classifier_forward.1} parent=1 // pred_region
      _
    $region25: #{linear_classifier_forward.1} parent=1 // pred_fallthru
      _
    // Predicated region
    $region26: #{linear_classifier_forward.1} parent=1 // pred_check
      _
    $region27: #{linear_classifier_forward.1} parent=1 // pred_check_branch
      %26 = sbr.rel (0) target = $region29
    $region28: #{linear_classifier_forward.1} parent=1 // pred_region
      _
    $region29: #{linear_classifier_forward.1} parent=1 // pred_fallthru
      _
    %v27 = vld [vmem:[%s0] sm:$0xff]
    %v28 = vld [vmem:[%s0 + $0x8] sm:$0xff]
    %v29 = vld [vmem:[%s0 + $0x10] sm:$0xff]
    %v30 = vld [vmem:[%s0 + $0x18] sm:$0xff]
    %v31 = vld [vmem:[%s0 + $0x20] sm:$0xff]
    %v32 = vld [vmem:[%s0 + $0x28] sm:$0xff]
    %v33 = vld [vmem:[%s0 + $0x30] sm:$0xff]
    %v34 = vld [vmem:[%s0 + $0x38] sm:$0xff]
    %v35 = vld [vmem:[%s0 + $0x40] sm:$0xff]
    %v36 = vld [vmem:[%s0 + $0x48] sm:$0xff]
    %v37 = vld [vmem:[%s0 + $0x50] sm:$0xff]
    %v38 = vld [vmem:[%s0 + $0x58] sm:$0xff]
    %v39 = vld [vmem:[%s0 + $0x60] sm:$0xff]
    %v40 = vld [vmem:[%s0 + $0x68] sm:$0xff]
    %v41 = vld [vmem:[%s0 + $0x70] sm:$0xff]
    %v42 = vld [vmem:[%s0 + $0x78] sm:$0xff]
    %v43 = vld [vmem:[%s0 + $0x80] sm:$0xff]
    %v44 = vld [vmem:[%s0 + $0x88] sm:$0xff]
    %v45 = vld [vmem:[%s0 + $0x90] sm:$0xff]
    %v46 = vld [vmem:[%s0 + $0x98] sm:$0xff]
    %v47 = vld [vmem:[%s0 + $0xa0] sm:$0xff]
    %v48 = vld [vmem:[%s0 + $0xa8] sm:$0xff]
    %v49 = vld [vmem:[%s0 + $0xb0] sm:$0xff]
    %v50 = vld [vmem:[%s0 + $0xb8] sm:$0xff]
    %v51 = vld [vmem:[%s0 + $0xc0] sm:$0xff]
    %v52 = vld [vmem:[%s0 + $0xc8] sm:$0xff]
    %v53 = vld [vmem:[%s0 + $0xd0] sm:$0xff]
    %v54 = vld [vmem:[%s0 + $0xd8] sm:$0xff]
    %v55 = vld [vmem:[%s0 + $0xe0] sm:$0xff]
    %v56 = vld [vmem:[%s0 + $0xe8] sm:$0xff]
    %v57 = vld [vmem:[%s0 + $0xf0] sm:$0xff]
    %v58 = vld [vmem:[%s0 + $0xf8] sm:$0xff]
    %v59 = vld [vmem:[%s0 + $0x100] sm:$0xff]
    %v60 = vld [vmem:[%s0 + $0x108] sm:$0xff]
    %v61 = vld [vmem:[%s0 + $0x110] sm:$0xff]
    %v62 = vld [vmem:[%s0 + $0x118] sm:$0xff]
    %v63 = vld [vmem:[%s0 + $0x120] sm:$0xff]
    %v64 = vld [vmem:[%s0 + $0x128] sm:$0xff]
    %v65 = vld [vmem:[%s0 + $0x130] sm:$0xff]
    %v66 = vld [vmem:[%s0 + $0x138] sm:$0xff]
    %v67 = vld [vmem:[%s0 + $0x140] sm:$0xff]
    %v68 = vld [vmem:[%s0 + $0x148] sm:$0xff]
    %v69 = vld [vmem:[%s0 + $0x150] sm:$0xff]
    %v70 = vld [vmem:[%s0 + $0x158] sm:$0xff]
    %v71 = vld [vmem:[%s0 + $0x160] sm:$0xff]
    %v72 = vld [vmem:[%s0 + $0x168] sm:$0xff]
    %v73 = vld [vmem:[%s0 + $0x170] sm:$0xff]
    %v74 = vld [vmem:[%s0 + $0x178] sm:$0xff]
    %123 = vst [vmem:[#allocation1] ss:$4 sm:$0xff] %v27
    %s124 = scalar_lea.vmem [#allocation1], 1
    %125 = vst [vmem:[%s124] ss:$4 sm:$0xff] %v33
    %s126 = scalar_lea.vmem [#allocation1], 2
    %127 = vst [vmem:[%s126] ss:$4 sm:$0xff] %v39
    %s128 = scalar_lea.vmem [#allocation1], 3
    %129 = vst [vmem:[%s128] ss:$4 sm:$0xff] %v45
    %s130 = scalar_lea.vmem [#allocation1], 32
    %131 = vst [vmem:[%s130] ss:$4 sm:$0xff] %v28
    %s132 = scalar_lea.vmem [#allocation1], 33
    %133 = vst [vmem:[%s132] ss:$4 sm:$0xff] %v34
    %s134 = scalar_lea.vmem [#allocation1], 34
    %135 = vst [vmem:[%s134] ss:$4 sm:$0xff] %v40
    %s136 = scalar_lea.vmem [#allocation1], 35
    %137 = vst [vmem:[%s136] ss:$4 sm:$0xff] %v46
    %v138 = vld.sshfl [vmem:[#allocation1] sm:$0xff pattern:$0x73625140]
    %v139 = vld.sshfl [vmem:[#allocation1 + $0x8] sm:$0xff pattern:$0x73625140]
    %v140 = vld.sshfl [vmem:[#allocation1 + $0x10] sm:$0xff pattern:$0x73625140]
    %v141 = vld.sshfl [vmem:[#allocation1 + $0x18] sm:$0xff pattern:$0x73625140]
    %v142 = vld.sshfl [vmem:[#allocation1 + $0x20] sm:$0xff pattern:$0x73625140]
    %v143 = vld.sshfl [vmem:[#allocation1 + $0x28] sm:$0xff pattern:$0x73625140]
    %v144 = vld.sshfl [vmem:[#allocation1 + $0x30] sm:$0xff pattern:$0x73625140]
    %v145 = vld.sshfl [vmem:[#allocation1 + $0x38] sm:$0xff pattern:$0x73625140]
    %146 = vst [vmem:[#allocation1] ss:$4 sm:$0xff] %v29
    %147 = vst [vmem:[%s124] ss:$4 sm:$0xff] %v35
    %148 = vst [vmem:[%s126] ss:$4 sm:$0xff] %v41
    %149 = vst [vmem:[%s128] ss:$4 sm:$0xff] %v47
    %150 = vst [vmem:[%s130] ss:$4 sm:$0xff] %v30
    %151 = vst [vmem:[%s132] ss:$4 sm:$0xff] %v36
    %152 = vst [vmem:[%s134] ss:$4 sm:$0xff] %v42
    %153 = vst [vmem:[%s136] ss:$4 sm:$0xff] %v48
    %v154 = vld.sshfl [vmem:[#allocation1] sm:$0xff pattern:$0x73625140]
    %v155 = vld.sshfl [vmem:[#allocation1 + $0x8] sm:$0xff pattern:$0x73625140]
    %v156 = vld.sshfl [vmem:[#allocation1 + $0x10] sm:$0xff pattern:$0x73625140]
    %v157 = vld.sshfl [vmem:[#allocation1 + $0x18] sm:$0xff pattern:$0x73625140]
    %v158 = vld.sshfl [vmem:[#allocation1 + $0x20] sm:$0xff pattern:$0x73625140]
    %v159 = vld.sshfl [vmem:[#allocation1 + $0x28] sm:$0xff pattern:$0x73625140]
    %v160 = vld.sshfl [vmem:[#allocation1 + $0x30] sm:$0xff pattern:$0x73625140]
    %v161 = vld.sshfl [vmem:[#allocation1 + $0x38] sm:$0xff pattern:$0x73625140]
    %162 = vst [vmem:[#allocation1] ss:$4 sm:$0xff] %v31
    %163 = vst [vmem:[%s124] ss:$4 sm:$0xff] %v37
    %164 = vst [vmem:[%s126] ss:$4 sm:$0xff] %v43
    %165 = vst [vmem:[%s128] ss:$4 sm:$0xff] %v49
    %166 = vst [vmem:[%s130] ss:$4 sm:$0xff] %v32
    %167 = vst [vmem:[%s132] ss:$4 sm:$0xff] %v38
    %168 = vst [vmem:[%s134] ss:$4 sm:$0xff] %v44
    %169 = vst [vmem:[%s136] ss:$4 sm:$0xff] %v50
    %v170 = vld.sshfl [vmem:[#allocation1] sm:$0xff pattern:$0x73625140]
    %v171 = vld.sshfl [vmem:[#allocation1 + $0x8] sm:$0xff pattern:$0x73625140]
    %v172 = vld.sshfl [vmem:[#allocation1 + $0x10] sm:$0xff pattern:$0x73625140]
    %v173 = vld.sshfl [vmem:[#allocation1 + $0x18] sm:$0xff pattern:$0x73625140]
    %v174 = vld.sshfl [vmem:[#allocation1 + $0x20] sm:$0xff pattern:$0x73625140]
    %v175 = vld.sshfl [vmem:[#allocation1 + $0x28] sm:$0xff pattern:$0x73625140]
    %v176 = vld.sshfl [vmem:[#allocation1 + $0x30] sm:$0xff pattern:$0x73625140]
    %v177 = vld.sshfl [vmem:[#allocation1 + $0x38] sm:$0xff pattern:$0x73625140]
    %178 = vst [vmem:[#allocation1] ss:$4 sm:$0xff] %v51
    %179 = vst [vmem:[%s124] ss:$4 sm:$0xff] %v57
    %180 = vst [vmem:[%s126] ss:$4 sm:$0xff] %v63
    %181 = vst [vmem:[%s128] ss:$4 sm:$0xff] %v69
    %182 = vst [vmem:[%s130] ss:$4 sm:$0xff] %v52
    %183 = vst [vmem:[%s132] ss:$4 sm:$0xff] %v58
    %184 = vst [vmem:[%s134] ss:$4 sm:$0xff] %v64
    %185 = vst [vmem:[%s136] ss:$4 sm:$0xff] %v70
    %v186 = vld.sshfl [vmem:[#allocation1] sm:$0xff pattern:$0x73625140]
    %v187 = vld.sshfl [vmem:[#allocation1 + $0x8] sm:$0xff pattern:$0x73625140]
    %v188 = vld.sshfl [vmem:[#allocation1 + $0x10] sm:$0xff pattern:$0x73625140]
    %v189 = vld.sshfl [vmem:[#allocation1 + $0x18] sm:$0xff pattern:$0x73625140]
    %v190 = vld.sshfl [vmem:[#allocation1 + $0x20] sm:$0xff pattern:$0x73625140]
    %v191 = vld.sshfl [vmem:[#allocation1 + $0x28] sm:$0xff pattern:$0x73625140]
    %v192 = vld.sshfl [vmem:[#allocation1 + $0x30] sm:$0xff pattern:$0x73625140]
    %v193 = vld.sshfl [vmem:[#allocation1 + $0x38] sm:$0xff pattern:$0x73625140]
    %194 = vst [vmem:[#allocation1] ss:$4 sm:$0xff] %v53
    %195 = vst [vmem:[%s124] ss:$4 sm:$0xff] %v59
    %196 = vst [vmem:[%s126] ss:$4 sm:$0xff] %v65
    %197 = vst [vmem:[%s128] ss:$4 sm:$0xff] %v71
    %198 = vst [vmem:[%s130] ss:$4 sm:$0xff] %v54
    %199 = vst [vmem:[%s132] ss:$4 sm:$0xff] %v60
    %200 = vst [vmem:[%s134] ss:$4 sm:$0xff] %v66
    %201 = vst [vmem:[%s136] ss:$4 sm:$0xff] %v72
    %v202 = vld.sshfl [vmem:[#allocation1] sm:$0xff pattern:$0x73625140]
    %v203 = vld.sshfl [vmem:[#allocation1 + $0x8] sm:$0xff pattern:$0x73625140]
    %v204 = vld.sshfl [vmem:[#allocation1 + $0x10] sm:$0xff pattern:$0x73625140]
    %v205 = vld.sshfl [vmem:[#allocation1 + $0x18] sm:$0xff pattern:$0x73625140]
    %v206 = vld.sshfl [vmem:[#allocation1 + $0x20] sm:$0xff pattern:$0x73625140]
    %v207 = vld.sshfl [vmem:[#allocation1 + $0x28] sm:$0xff pattern:$0x73625140]
    %v208 = vld.sshfl [vmem:[#allocation1 + $0x30] sm:$0xff pattern:$0x73625140]
    %v209 = vld.sshfl [vmem:[#allocation1 + $0x38] sm:$0xff pattern:$0x73625140]
    %210 = vst [vmem:[#allocation1] ss:$4 sm:$0xff] %v55
    %211 = vst [vmem:[%s124] ss:$4 sm:$0xff] %v61
    %212 = vst [vmem:[%s126] ss:$4 sm:$0xff] %v67
    %213 = vst [vmem:[%s128] ss:$4 sm:$0xff] %v73
    %214 = vst [vmem:[%s130] ss:$4 sm:$0xff] %v56
    %215 = vst [vmem:[%s132] ss:$4 sm:$0xff] %v62
    %216 = vst [vmem:[%s134] ss:$4 sm:$0xff] %v68
    %217 = vst [vmem:[%s136] ss:$4 sm:$0xff] %v74
    %v218 = vld.sshfl [vmem:[#allocation1] sm:$0xff pattern:$0x73625140]
    %v219 = vld.sshfl [vmem:[#allocation1 + $0x8] sm:$0xff pattern:$0x73625140]
    %v220 = vld.sshfl [vmem:[#allocation1 + $0x10] sm:$0xff pattern:$0x73625140]
    %v221 = vld.sshfl [vmem:[#allocation1 + $0x18] sm:$0xff pattern:$0x73625140]
    %v222 = vld.sshfl [vmem:[#allocation1 + $0x20] sm:$0xff pattern:$0x73625140]
    %v223 = vld.sshfl [vmem:[#allocation1 + $0x28] sm:$0xff pattern:$0x73625140]
    %v224 = vld.sshfl [vmem:[#allocation1 + $0x30] sm:$0xff pattern:$0x73625140]
    %v225 = vld.sshfl [vmem:[#allocation1 + $0x38] sm:$0xff pattern:$0x73625140]
    %v274 = vpack.c.bf16 %v186, %v138
    %v275 = vpack.c.bf16 %v187, %v139
    %v276 = vpack.c.bf16 %v188, %v140
    %v277 = vpack.c.bf16 %v189, %v141
    %v278 = vpack.c.bf16 %v190, %v142
    %v279 = vpack.c.bf16 %v191, %v143
    %v280 = vpack.c.bf16 %v192, %v144
    %v281 = vpack.c.bf16 %v193, %v145
    %v282 = vpack.c.bf16 %v202, %v154
    %v283 = vpack.c.bf16 %v203, %v155
    %v284 = vpack.c.bf16 %v204, %v156
    %v285 = vpack.c.bf16 %v205, %v157
    %v286 = vpack.c.bf16 %v206, %v158
    %v287 = vpack.c.bf16 %v207, %v159
    %v288 = vpack.c.bf16 %v208, %v160
    %v289 = vpack.c.bf16 %v209, %v161
    %v290 = vpack.c.bf16 %v218, %v170
    %v291 = vpack.c.bf16 %v219, %v171
    %v292 = vpack.c.bf16 %v220, %v172
    %v293 = vpack.c.bf16 %v221, %v173
    %v294 = vpack.c.bf16 %v222, %v174
    %v295 = vpack.c.bf16 %v223, %v175
    %v296 = vpack.c.bf16 %v224, %v176
    %v297 = vpack.c.bf16 %v225, %v177
    %v298 = vld [vmem:[%s1] sm:$0xf]
    %v299 = vld [vmem:[%s1 + $0x4] sm:$0xf]
    %v300 = vld [vmem:[%s1 + $0x8] sm:$0xf]
    %v301 = vld [vmem:[%s1 + $0xc] sm:$0xf]
    %v302 = vld [vmem:[%s1 + $0x10] sm:$0xf]
    %v303 = vld [vmem:[%s1 + $0x14] sm:$0xf]
    %v304 = vld [vmem:[%s1 + $0x18] sm:$0xf]
    %v305 = vld [vmem:[%s1 + $0x1c] sm:$0xf]
    %v306 = vld [vmem:[%s1 + $0x20] sm:$0xf]
    %v307 = vld [vmem:[%s1 + $0x24] sm:$0xf]
    %v308 = vld [vmem:[%s1 + $0x28] sm:$0xf]
    %v309 = vld [vmem:[%s1 + $0x2c] sm:$0xf]
    %v310 = vld [vmem:[%s1 + $0x30] sm:$0xf]
    %v311 = vld [vmem:[%s1 + $0x34] sm:$0xf]
    %v312 = vld [vmem:[%s1 + $0x38] sm:$0xf]
    %v313 = vld [vmem:[%s1 + $0x3c] sm:$0xf]
    %v314 = vld [vmem:[%s1 + $0x40] sm:$0xf]
    %v315 = vld [vmem:[%s1 + $0x44] sm:$0xf]
    %v316 = vld [vmem:[%s1 + $0x48] sm:$0xf]
    %v317 = vld [vmem:[%s1 + $0x4c] sm:$0xf]
    %v318 = vld [vmem:[%s1 + $0x50] sm:$0xf]
    %v319 = vld [vmem:[%s1 + $0x54] sm:$0xf]
    %v320 = vld [vmem:[%s1 + $0x58] sm:$0xf]
    %v321 = vld [vmem:[%s1 + $0x5c] sm:$0xf]
    %v322 = vld [vmem:[%s1 + $0x60] sm:$0xf]
    %v323 = vld [vmem:[%s1 + $0x64] sm:$0xf]
    %v324 = vld [vmem:[%s1 + $0x68] sm:$0xf]
    %v325 = vld [vmem:[%s1 + $0x6c] sm:$0xf]
    %v326 = vld [vmem:[%s1 + $0x70] sm:$0xf]
    %v327 = vld [vmem:[%s1 + $0x74] sm:$0xf]
    %v328 = vld [vmem:[%s1 + $0x78] sm:$0xf]
    %v329 = vld [vmem:[%s1 + $0x7c] sm:$0xf]
    %v330 = vld [vmem:[%s1 + $0x80] sm:$0xf]
    %v331 = vld [vmem:[%s1 + $0x84] sm:$0xf]
    %v332 = vld [vmem:[%s1 + $0x88] sm:$0xf]
    %v333 = vld [vmem:[%s1 + $0x8c] sm:$0xf]
    %v334 = vld [vmem:[%s1 + $0x90] sm:$0xf]
    %v335 = vld [vmem:[%s1 + $0x94] sm:$0xf]
    %v336 = vld [vmem:[%s1 + $0x98] sm:$0xf]
    %v337 = vld [vmem:[%s1 + $0x9c] sm:$0xf]
    %v338 = vld [vmem:[%s1 + $0xa0] sm:$0xf]
    %v339 = vld [vmem:[%s1 + $0xa4] sm:$0xf]
    %v340 = vld [vmem:[%s1 + $0xa8] sm:$0xf]
    %v341 = vld [vmem:[%s1 + $0xac] sm:$0xf]
    %v342 = vld [vmem:[%s1 + $0xb0] sm:$0xf]
    %v343 = vld [vmem:[%s1 + $0xb4] sm:$0xf]
    %v344 = vld [vmem:[%s1 + $0xb8] sm:$0xf]
    %v345 = vld [vmem:[%s1 + $0xbc] sm:$0xf]
    %v346 = vld [vmem:[%s1 + $0xc0] sm:$0xf]
    %v347 = vld [vmem:[%s1 + $0xc4] sm:$0xf]
    %v348 = vld [vmem:[%s1 + $0xc8] sm:$0xf]
    %v349 = vld [vmem:[%s1 + $0xcc] sm:$0xf]
    %v350 = vld [vmem:[%s1 + $0xd0] sm:$0xf]
    %v351 = vld [vmem:[%s1 + $0xd4] sm:$0xf]
    %v352 = vld [vmem:[%s1 + $0xd8] sm:$0xf]
    %v353 = vld [vmem:[%s1 + $0xdc] sm:$0xf]
    %v354 = vld [vmem:[%s1 + $0xe0] sm:$0xf]
    %v355 = vld [vmem:[%s1 + $0xe4] sm:$0xf]
    %v356 = vld [vmem:[%s1 + $0xe8] sm:$0xf]
    %v357 = vld [vmem:[%s1 + $0xec] sm:$0xf]
    %v358 = vld [vmem:[%s1 + $0xf0] sm:$0xf]
    %v359 = vld [vmem:[%s1 + $0xf4] sm:$0xf]
    %v360 = vld [vmem:[%s1 + $0xf8] sm:$0xf]
    %v361 = vld [vmem:[%s1 + $0xfc] sm:$0xf]
    %v362 = vld [vmem:[%s1 + $0x100] sm:$0xf]
    %v363 = vld [vmem:[%s1 + $0x104] sm:$0xf]
    %v364 = vld [vmem:[%s1 + $0x108] sm:$0xf]
    %v365 = vld [vmem:[%s1 + $0x10c] sm:$0xf]
    %v366 = vld [vmem:[%s1 + $0x110] sm:$0xf]
    %v367 = vld [vmem:[%s1 + $0x114] sm:$0xf]
    %v368 = vld [vmem:[%s1 + $0x118] sm:$0xf]
    %v369 = vld [vmem:[%s1 + $0x11c] sm:$0xf]
    %v370 = vld [vmem:[%s1 + $0x120] sm:$0xf]
    %v371 = vld [vmem:[%s1 + $0x124] sm:$0xf]
    %v372 = vld [vmem:[%s1 + $0x128] sm:$0xf]
    %v373 = vld [vmem:[%s1 + $0x12c] sm:$0xf]
    %v374 = vld [vmem:[%s1 + $0x130] sm:$0xf]
    %v375 = vld [vmem:[%s1 + $0x134] sm:$0xf]
    %v376 = vld [vmem:[%s1 + $0x138] sm:$0xf]
    %v377 = vld [vmem:[%s1 + $0x13c] sm:$0xf]
    %v378 = vld [vmem:[%s1 + $0x140] sm:$0xf]
    %v379 = vld [vmem:[%s1 + $0x144] sm:$0xf]
    %v380 = vld [vmem:[%s1 + $0x148] sm:$0xf]
    %v381 = vld [vmem:[%s1 + $0x14c] sm:$0xf]
    %v382 = vld [vmem:[%s1 + $0x150] sm:$0xf]
    %v383 = vld [vmem:[%s1 + $0x154] sm:$0xf]
    %v384 = vld [vmem:[%s1 + $0x158] sm:$0xf]
    %v385 = vld [vmem:[%s1 + $0x15c] sm:$0xf]
    %v386 = vld [vmem:[%s1 + $0x160] sm:$0xf]
    %v387 = vld [vmem:[%s1 + $0x164] sm:$0xf]
    %v388 = vld [vmem:[%s1 + $0x168] sm:$0xf]
    %v389 = vld [vmem:[%s1 + $0x16c] sm:$0xf]
    %v390 = vld [vmem:[%s1 + $0x170] sm:$0xf]
    %v391 = vld [vmem:[%s1 + $0x174] sm:$0xf]
    %v392 = vld [vmem:[%s1 + $0x178] sm:$0xf]
    %v393 = vld [vmem:[%s1 + $0x17c] sm:$0xf]
    %v394 = vld [vmem:[%s1 + $0x180] sm:$0xf]
    %v395 = vld [vmem:[%s1 + $0x184] sm:$0xf]
    %v396 = vld [vmem:[%s1 + $0x188] sm:$0xf]
    %v397 = vld [vmem:[%s1 + $0x18c] sm:$0xf]
    %v398 = vld [vmem:[%s1 + $0x190] sm:$0xf]
    %v399 = vld [vmem:[%s1 + $0x194] sm:$0xf]
    %v400 = vld [vmem:[%s1 + $0x198] sm:$0xf]
    %v401 = vld [vmem:[%s1 + $0x19c] sm:$0xf]
    %v402 = vld [vmem:[%s1 + $0x1a0] sm:$0xf]
    %v403 = vld [vmem:[%s1 + $0x1a4] sm:$0xf]
    %v404 = vld [vmem:[%s1 + $0x1a8] sm:$0xf]
    %v405 = vld [vmem:[%s1 + $0x1ac] sm:$0xf]
    %v406 = vld [vmem:[%s1 + $0x1b0] sm:$0xf]
    %v407 = vld [vmem:[%s1 + $0x1b4] sm:$0xf]
    %v408 = vld [vmem:[%s1 + $0x1b8] sm:$0xf]
    %v409 = vld [vmem:[%s1 + $0x1bc] sm:$0xf]
    %v410 = vld [vmem:[%s1 + $0x1c0] sm:$0xf]
    %v411 = vld [vmem:[%s1 + $0x1c4] sm:$0xf]
    %v412 = vld [vmem:[%s1 + $0x1c8] sm:$0xf]
    %v413 = vld [vmem:[%s1 + $0x1cc] sm:$0xf]
    %v414 = vld [vmem:[%s1 + $0x1d0] sm:$0xf]
    %v415 = vld [vmem:[%s1 + $0x1d4] sm:$0xf]
    %v416 = vld [vmem:[%s1 + $0x1d8] sm:$0xf]
    %v417 = vld [vmem:[%s1 + $0x1dc] sm:$0xf]
    %v418 = vld [vmem:[%s1 + $0x1e0] sm:$0xf]
    %v419 = vld [vmem:[%s1 + $0x1e4] sm:$0xf]
    %v420 = vld [vmem:[%s1 + $0x1e8] sm:$0xf]
    %v421 = vld [vmem:[%s1 + $0x1ec] sm:$0xf]
    %v422 = vld [vmem:[%s1 + $0x1f0] sm:$0xf]
    %v423 = vld [vmem:[%s1 + $0x1f4] sm:$0xf]
    %v424 = vld [vmem:[%s1 + $0x1f8] sm:$0xf]
    %v425 = vld [vmem:[%s1 + $0x1fc] sm:$0xf]
    %v426 = vld [vmem:[%s1 + $0x200] sm:$0xf]
    %v427 = vld [vmem:[%s1 + $0x204] sm:$0xf]
    %v428 = vld [vmem:[%s1 + $0x208] sm:$0xf]
    %v429 = vld [vmem:[%s1 + $0x20c] sm:$0xf]
    %v430 = vld [vmem:[%s1 + $0x210] sm:$0xf]
    %v431 = vld [vmem:[%s1 + $0x214] sm:$0xf]
    %v432 = vld [vmem:[%s1 + $0x218] sm:$0xf]
    %v433 = vld [vmem:[%s1 + $0x21c] sm:$0xf]
    %v434 = vld [vmem:[%s1 + $0x220] sm:$0xf]
    %v435 = vld [vmem:[%s1 + $0x224] sm:$0xf]
    %v436 = vld [vmem:[%s1 + $0x228] sm:$0xf]
    %v437 = vld [vmem:[%s1 + $0x22c] sm:$0xf]
    %v438 = vld [vmem:[%s1 + $0x230] sm:$0xf]
    %v439 = vld [vmem:[%s1 + $0x234] sm:$0xf]
    %v440 = vld [vmem:[%s1 + $0x238] sm:$0xf]
    %v441 = vld [vmem:[%s1 + $0x23c] sm:$0xf]
    %v442 = vld [vmem:[%s1 + $0x240] sm:$0xf]
    %v443 = vld [vmem:[%s1 + $0x244] sm:$0xf]
    %v444 = vld [vmem:[%s1 + $0x248] sm:$0xf]
    %v445 = vld [vmem:[%s1 + $0x24c] sm:$0xf]
    %v446 = vld [vmem:[%s1 + $0x250] sm:$0xf]
    %v447 = vld [vmem:[%s1 + $0x254] sm:$0xf]
    %v448 = vld [vmem:[%s1 + $0x258] sm:$0xf]
    %v449 = vld [vmem:[%s1 + $0x25c] sm:$0xf]
    %v450 = vld [vmem:[%s1 + $0x260] sm:$0xf]
    %v451 = vld [vmem:[%s1 + $0x264] sm:$0xf]
    %v452 = vld [vmem:[%s1 + $0x268] sm:$0xf]
    %v453 = vld [vmem:[%s1 + $0x26c] sm:$0xf]
    %v454 = vld [vmem:[%s1 + $0x270] sm:$0xf]
    %v455 = vld [vmem:[%s1 + $0x274] sm:$0xf]
    %v456 = vld [vmem:[%s1 + $0x278] sm:$0xf]
    %v457 = vld [vmem:[%s1 + $0x27c] sm:$0xf]
    %v458 = vld [vmem:[%s1 + $0x280] sm:$0xf]
    %v459 = vld [vmem:[%s1 + $0x284] sm:$0xf]
    %v460 = vld [vmem:[%s1 + $0x288] sm:$0xf]
    %v461 = vld [vmem:[%s1 + $0x28c] sm:$0xf]
    %v462 = vld [vmem:[%s1 + $0x290] sm:$0xf]
    %v463 = vld [vmem:[%s1 + $0x294] sm:$0xf]
    %v464 = vld [vmem:[%s1 + $0x298] sm:$0xf]
    %v465 = vld [vmem:[%s1 + $0x29c] sm:$0xf]
    %v466 = vld [vmem:[%s1 + $0x2a0] sm:$0xf]
    %v467 = vld [vmem:[%s1 + $0x2a4] sm:$0xf]
    %v468 = vld [vmem:[%s1 + $0x2a8] sm:$0xf]
    %v469 = vld [vmem:[%s1 + $0x2ac] sm:$0xf]
    %v470 = vld [vmem:[%s1 + $0x2b0] sm:$0xf]
    %v471 = vld [vmem:[%s1 + $0x2b4] sm:$0xf]
    %v472 = vld [vmem:[%s1 + $0x2b8] sm:$0xf]
    %v473 = vld [vmem:[%s1 + $0x2bc] sm:$0xf]
    %v474 = vld [vmem:[%s1 + $0x2c0] sm:$0xf]
    %v475 = vld [vmem:[%s1 + $0x2c4] sm:$0xf]
    %v476 = vld [vmem:[%s1 + $0x2c8] sm:$0xf]
    %v477 = vld [vmem:[%s1 + $0x2cc] sm:$0xf]
    %v478 = vld [vmem:[%s1 + $0x2d0] sm:$0xf]
    %v479 = vld [vmem:[%s1 + $0x2d4] sm:$0xf]
    %v480 = vld [vmem:[%s1 + $0x2d8] sm:$0xf]
    %v481 = vld [vmem:[%s1 + $0x2dc] sm:$0xf]
    %v482 = vld [vmem:[%s1 + $0x2e0] sm:$0xf]
    %v483 = vld [vmem:[%s1 + $0x2e4] sm:$0xf]
    %v484 = vld [vmem:[%s1 + $0x2e8] sm:$0xf]
    %v485 = vld [vmem:[%s1 + $0x2ec] sm:$0xf]
    %v486 = vld [vmem:[%s1 + $0x2f0] sm:$0xf]
    %v487 = vld [vmem:[%s1 + $0x2f4] sm:$0xf]
    %v488 = vld [vmem:[%s1 + $0x2f8] sm:$0xf]
    %v489 = vld [vmem:[%s1 + $0x2fc] sm:$0xf]
    %v490 = vld [vmem:[%s1 + $0x300] sm:$0xf]
    %v491 = vld [vmem:[%s1 + $0x304] sm:$0xf]
    %v492 = vld [vmem:[%s1 + $0x308] sm:$0xf]
    %v493 = vld [vmem:[%s1 + $0x30c] sm:$0xf]
    %v494 = vld [vmem:[%s1 + $0x310] sm:$0xf]
    %v495 = vld [vmem:[%s1 + $0x314] sm:$0xf]
    %v496 = vld [vmem:[%s1 + $0x318] sm:$0xf]
    %v497 = vld [vmem:[%s1 + $0x31c] sm:$0xf]
    %v498 = vld [vmem:[%s1 + $0x320] sm:$0xf]
    %v499 = vld [vmem:[%s1 + $0x324] sm:$0xf]
    %v500 = vld [vmem:[%s1 + $0x328] sm:$0xf]
    %v501 = vld [vmem:[%s1 + $0x32c] sm:$0xf]
    %v502 = vld [vmem:[%s1 + $0x330] sm:$0xf]
    %v503 = vld [vmem:[%s1 + $0x334] sm:$0xf]
    %v504 = vld [vmem:[%s1 + $0x338] sm:$0xf]
    %v505 = vld [vmem:[%s1 + $0x33c] sm:$0xf]
    %v506 = vld [vmem:[%s1 + $0x340] sm:$0xf]
    %v507 = vld [vmem:[%s1 + $0x344] sm:$0xf]
    %v508 = vld [vmem:[%s1 + $0x348] sm:$0xf]
    %v509 = vld [vmem:[%s1 + $0x34c] sm:$0xf]
    %v510 = vld [vmem:[%s1 + $0x350] sm:$0xf]
    %v511 = vld [vmem:[%s1 + $0x354] sm:$0xf]
    %v512 = vld [vmem:[%s1 + $0x358] sm:$0xf]
    %v513 = vld [vmem:[%s1 + $0x35c] sm:$0xf]
    %v514 = vld [vmem:[%s1 + $0x360] sm:$0xf]
    %v515 = vld [vmem:[%s1 + $0x364] sm:$0xf]
    %v516 = vld [vmem:[%s1 + $0x368] sm:$0xf]
    %v517 = vld [vmem:[%s1 + $0x36c] sm:$0xf]
    %v518 = vld [vmem:[%s1 + $0x370] sm:$0xf]
    %v519 = vld [vmem:[%s1 + $0x374] sm:$0xf]
    %v520 = vld [vmem:[%s1 + $0x378] sm:$0xf]
    %v521 = vld [vmem:[%s1 + $0x37c] sm:$0xf]
    %v522 = vld [vmem:[%s1 + $0x380] sm:$0xf]
    %v523 = vld [vmem:[%s1 + $0x384] sm:$0xf]
    %v524 = vld [vmem:[%s1 + $0x388] sm:$0xf]
    %v525 = vld [vmem:[%s1 + $0x38c] sm:$0xf]
    %v526 = vld [vmem:[%s1 + $0x390] sm:$0xf]
    %v527 = vld [vmem:[%s1 + $0x394] sm:$0xf]
    %v528 = vld [vmem:[%s1 + $0x398] sm:$0xf]
    %v529 = vld [vmem:[%s1 + $0x39c] sm:$0xf]
    %v530 = vld [vmem:[%s1 + $0x3a0] sm:$0xf]
    %v531 = vld [vmem:[%s1 + $0x3a4] sm:$0xf]
    %v532 = vld [vmem:[%s1 + $0x3a8] sm:$0xf]
    %v533 = vld [vmem:[%s1 + $0x3ac] sm:$0xf]
    %v534 = vld [vmem:[%s1 + $0x3b0] sm:$0xf]
    %v535 = vld [vmem:[%s1 + $0x3b4] sm:$0xf]
    %v536 = vld [vmem:[%s1 + $0x3b8] sm:$0xf]
    %v537 = vld [vmem:[%s1 + $0x3bc] sm:$0xf]
    %v538 = vld [vmem:[%s1 + $0x3c0] sm:$0xf]
    %v539 = vld [vmem:[%s1 + $0x3c4] sm:$0xf]
    %v540 = vld [vmem:[%s1 + $0x3c8] sm:$0xf]
    %v541 = vld [vmem:[%s1 + $0x3cc] sm:$0xf]
    %v542 = vld [vmem:[%s1 + $0x3d0] sm:$0xf]
    %v543 = vld [vmem:[%s1 + $0x3d4] sm:$0xf]
    %v544 = vld [vmem:[%s1 + $0x3d8] sm:$0xf]
    %v545 = vld [vmem:[%s1 + $0x3dc] sm:$0xf]
    %v546 = vld [vmem:[%s1 + $0x3e0] sm:$0xf]
    %v547 = vld [vmem:[%s1 + $0x3e4] sm:$0xf]
    %v548 = vld [vmem:[%s1 + $0x3e8] sm:$0xf]
    %v549 = vld [vmem:[%s1 + $0x3ec] sm:$0xf]
    %v550 = vld [vmem:[%s1 + $0x3f0] sm:$0xf]
    %v551 = vld [vmem:[%s1 + $0x3f4] sm:$0xf]
    %v552 = vld [vmem:[%s1 + $0x3f8] sm:$0xf]
    %v553 = vld [vmem:[%s1 + $0x3fc] sm:$0xf]
    %v554 = vld [vmem:[%s1 + $0x400] sm:$0xf]
    %v555 = vld [vmem:[%s1 + $0x404] sm:$0xf]
    %v556 = vld [vmem:[%s1 + $0x408] sm:$0xf]
    %v557 = vld [vmem:[%s1 + $0x40c] sm:$0xf]
    %v558 = vld [vmem:[%s1 + $0x410] sm:$0xf]
    %v559 = vld [vmem:[%s1 + $0x414] sm:$0xf]
    %v560 = vld [vmem:[%s1 + $0x418] sm:$0xf]
    %v561 = vld [vmem:[%s1 + $0x41c] sm:$0xf]
    %v562 = vld [vmem:[%s1 + $0x420] sm:$0xf]
    %v563 = vld [vmem:[%s1 + $0x424] sm:$0xf]
    %v564 = vld [vmem:[%s1 + $0x428] sm:$0xf]
    %v565 = vld [vmem:[%s1 + $0x42c] sm:$0xf]
    %v566 = vld [vmem:[%s1 + $0x430] sm:$0xf]
    %v567 = vld [vmem:[%s1 + $0x434] sm:$0xf]
    %v568 = vld [vmem:[%s1 + $0x438] sm:$0xf]
    %v569 = vld [vmem:[%s1 + $0x43c] sm:$0xf]
    %v570 = vld [vmem:[%s1 + $0x440] sm:$0xf]
    %v571 = vld [vmem:[%s1 + $0x444] sm:$0xf]
    %v572 = vld [vmem:[%s1 + $0x448] sm:$0xf]
    %v573 = vld [vmem:[%s1 + $0x44c] sm:$0xf]
    %v574 = vld [vmem:[%s1 + $0x450] sm:$0xf]
    %v575 = vld [vmem:[%s1 + $0x454] sm:$0xf]
    %v576 = vld [vmem:[%s1 + $0x458] sm:$0xf]
    %v577 = vld [vmem:[%s1 + $0x45c] sm:$0xf]
    %v578 = vld [vmem:[%s1 + $0x460] sm:$0xf]
    %v579 = vld [vmem:[%s1 + $0x464] sm:$0xf]
    %v580 = vld [vmem:[%s1 + $0x468] sm:$0xf]
    %v581 = vld [vmem:[%s1 + $0x46c] sm:$0xf]
    %v582 = vld [vmem:[%s1 + $0x470] sm:$0xf]
    %v583 = vld [vmem:[%s1 + $0x474] sm:$0xf]
    %v584 = vld [vmem:[%s1 + $0x478] sm:$0xf]
    %v585 = vld [vmem:[%s1 + $0x47c] sm:$0xf]
    %v586 = vld [vmem:[%s1 + $0x480] sm:$0xf]
    %v587 = vld [vmem:[%s1 + $0x484] sm:$0xf]
    %v588 = vld [vmem:[%s1 + $0x488] sm:$0xf]
    %v589 = vld [vmem:[%s1 + $0x48c] sm:$0xf]
    %v590 = vld [vmem:[%s1 + $0x490] sm:$0xf]
    %v591 = vld [vmem:[%s1 + $0x494] sm:$0xf]
    %v592 = vld [vmem:[%s1 + $0x498] sm:$0xf]
    %v593 = vld [vmem:[%s1 + $0x49c] sm:$0xf]
    %v594 = vld [vmem:[%s1 + $0x4a0] sm:$0xf]
    %v595 = vld [vmem:[%s1 + $0x4a4] sm:$0xf]
    %v596 = vld [vmem:[%s1 + $0x4a8] sm:$0xf]
    %v597 = vld [vmem:[%s1 + $0x4ac] sm:$0xf]
    %v598 = vld [vmem:[%s1 + $0x4b0] sm:$0xf]
    %v599 = vld [vmem:[%s1 + $0x4b4] sm:$0xf]
    %v600 = vld [vmem:[%s1 + $0x4b8] sm:$0xf]
    %v601 = vld [vmem:[%s1 + $0x4bc] sm:$0xf]
    %v602 = vld [vmem:[%s1 + $0x4c0] sm:$0xf]
    %v603 = vld [vmem:[%s1 + $0x4c4] sm:$0xf]
    %v604 = vld [vmem:[%s1 + $0x4c8] sm:$0xf]
    %v605 = vld [vmem:[%s1 + $0x4cc] sm:$0xf]
    %v606 = vld [vmem:[%s1 + $0x4d0] sm:$0xf]
    %v607 = vld [vmem:[%s1 + $0x4d4] sm:$0xf]
    %v608 = vld [vmem:[%s1 + $0x4d8] sm:$0xf]
    %v609 = vld [vmem:[%s1 + $0x4dc] sm:$0xf]
    %v610 = vld [vmem:[%s1 + $0x4e0] sm:$0xf]
    %v611 = vld [vmem:[%s1 + $0x4e4] sm:$0xf]
    %v612 = vld [vmem:[%s1 + $0x4e8] sm:$0xf]
    %v613 = vld [vmem:[%s1 + $0x4ec] sm:$0xf]
    %v614 = vld [vmem:[%s1 + $0x4f0] sm:$0xf]
    %v615 = vld [vmem:[%s1 + $0x4f4] sm:$0xf]
    %v616 = vld [vmem:[%s1 + $0x4f8] sm:$0xf]
    %v617 = vld [vmem:[%s1 + $0x4fc] sm:$0xf]
    %v618 = vld [vmem:[%s1 + $0x500] sm:$0xf]
    %v619 = vld [vmem:[%s1 + $0x504] sm:$0xf]
    %v620 = vld [vmem:[%s1 + $0x508] sm:$0xf]
    %v621 = vld [vmem:[%s1 + $0x50c] sm:$0xf]
    %v622 = vld [vmem:[%s1 + $0x510] sm:$0xf]
    %v623 = vld [vmem:[%s1 + $0x514] sm:$0xf]
    %v624 = vld [vmem:[%s1 + $0x518] sm:$0xf]
    %v625 = vld [vmem:[%s1 + $0x51c] sm:$0xf]
    %v626 = vld [vmem:[%s1 + $0x520] sm:$0xf]
    %v627 = vld [vmem:[%s1 + $0x524] sm:$0xf]
    %v628 = vld [vmem:[%s1 + $0x528] sm:$0xf]
    %v629 = vld [vmem:[%s1 + $0x52c] sm:$0xf]
    %v630 = vld [vmem:[%s1 + $0x530] sm:$0xf]
    %v631 = vld [vmem:[%s1 + $0x534] sm:$0xf]
    %v632 = vld [vmem:[%s1 + $0x538] sm:$0xf]
    %v633 = vld [vmem:[%s1 + $0x53c] sm:$0xf]
    %v634 = vld [vmem:[%s1 + $0x540] sm:$0xf]
    %v635 = vld [vmem:[%s1 + $0x544] sm:$0xf]
    %v636 = vld [vmem:[%s1 + $0x548] sm:$0xf]
    %v637 = vld [vmem:[%s1 + $0x54c] sm:$0xf]
    %v638 = vld [vmem:[%s1 + $0x550] sm:$0xf]
    %v639 = vld [vmem:[%s1 + $0x554] sm:$0xf]
    %v640 = vld [vmem:[%s1 + $0x558] sm:$0xf]
    %v641 = vld [vmem:[%s1 + $0x55c] sm:$0xf]
    %v642 = vld [vmem:[%s1 + $0x560] sm:$0xf]
    %v643 = vld [vmem:[%s1 + $0x564] sm:$0xf]
    %v644 = vld [vmem:[%s1 + $0x568] sm:$0xf]
    %v645 = vld [vmem:[%s1 + $0x56c] sm:$0xf]
    %v646 = vld [vmem:[%s1 + $0x570] sm:$0xf]
    %v647 = vld [vmem:[%s1 + $0x574] sm:$0xf]
    %v648 = vld [vmem:[%s1 + $0x578] sm:$0xf]
    %v649 = vld [vmem:[%s1 + $0x57c] sm:$0xf]
    %v650 = vld [vmem:[%s1 + $0x580] sm:$0xf]
    %v651 = vld [vmem:[%s1 + $0x584] sm:$0xf]
    %v652 = vld [vmem:[%s1 + $0x588] sm:$0xf]
    %v653 = vld [vmem:[%s1 + $0x58c] sm:$0xf]
    %v654 = vld [vmem:[%s1 + $0x590] sm:$0xf]
    %v655 = vld [vmem:[%s1 + $0x594] sm:$0xf]
    %v656 = vld [vmem:[%s1 + $0x598] sm:$0xf]
    %v657 = vld [vmem:[%s1 + $0x59c] sm:$0xf]
    %v658 = vld [vmem:[%s1 + $0x5a0] sm:$0xf]
    %v659 = vld [vmem:[%s1 + $0x5a4] sm:$0xf]
    %v660 = vld [vmem:[%s1 + $0x5a8] sm:$0xf]
    %v661 = vld [vmem:[%s1 + $0x5ac] sm:$0xf]
    %v662 = vld [vmem:[%s1 + $0x5b0] sm:$0xf]
    %v663 = vld [vmem:[%s1 + $0x5b4] sm:$0xf]
    %v664 = vld [vmem:[%s1 + $0x5b8] sm:$0xf]
    %v665 = vld [vmem:[%s1 + $0x5bc] sm:$0xf]
    %v666 = vld [vmem:[%s1 + $0x5c0] sm:$0xf]
    %v667 = vld [vmem:[%s1 + $0x5c4] sm:$0xf]
    %v668 = vld [vmem:[%s1 + $0x5c8] sm:$0xf]
    %v669 = vld [vmem:[%s1 + $0x5cc] sm:$0xf]
    %v670 = vld [vmem:[%s1 + $0x5d0] sm:$0xf]
    %v671 = vld [vmem:[%s1 + $0x5d4] sm:$0xf]
    %v672 = vld [vmem:[%s1 + $0x5d8] sm:$0xf]
    %v673 = vld [vmem:[%s1 + $0x5dc] sm:$0xf]
    %v674 = vld [vmem:[%s1 + $0x5e0] sm:$0xf]
    %v675 = vld [vmem:[%s1 + $0x5e4] sm:$0xf]
    %v676 = vld [vmem:[%s1 + $0x5e8] sm:$0xf]
    %v677 = vld [vmem:[%s1 + $0x5ec] sm:$0xf]
    %v678 = vld [vmem:[%s1 + $0x5f0] sm:$0xf]
    %v679 = vld [vmem:[%s1 + $0x5f4] sm:$0xf]
    %v680 = vld [vmem:[%s1 + $0x5f8] sm:$0xf]
    %v681 = vld [vmem:[%s1 + $0x5fc] sm:$0xf]
    %v682 = vld [vmem:[%s2] sm:$0x1]
    %v684 = vperm.slane %v682, 0
    %v1070 = vunpack.c.l.b16 %v298
    %v1071 = vunpack.c.l.b16 %v299
    %v1072 = vunpack.c.l.b16 %v300
    %v1073 = vunpack.c.l.b16 %v301
    %v1074 = vunpack.c.l.b16 %v302
    %v1075 = vunpack.c.l.b16 %v303
    %v1076 = vunpack.c.l.b16 %v304
    %v1077 = vunpack.c.l.b16 %v305
    %v1078 = vunpack.c.l.b16 %v306
    %v1079 = vunpack.c.l.b16 %v307
    %v1080 = vunpack.c.l.b16 %v308
    %v1081 = vunpack.c.l.b16 %v309
    %v1082 = vunpack.c.l.b16 %v310
    %v1083 = vunpack.c.l.b16 %v311
    %v1084 = vunpack.c.l.b16 %v312
    %v1085 = vunpack.c.l.b16 %v313
    %v1086 = vunpack.c.l.b16 %v314
    %v1087 = vunpack.c.l.b16 %v315
    %v1088 = vunpack.c.l.b16 %v316
    %v1089 = vunpack.c.l.b16 %v317
    %v1090 = vunpack.c.l.b16 %v318
    %v1091 = vunpack.c.l.b16 %v319
    %v1092 = vunpack.c.l.b16 %v320
    %v1093 = vunpack.c.l.b16 %v321
    %v1094 = vunpack.c.l.b16 %v322
    %v1095 = vunpack.c.l.b16 %v323
    %v1096 = vunpack.c.l.b16 %v324
    %v1097 = vunpack.c.l.b16 %v325
    %v1098 = vunpack.c.l.b16 %v326
    %v1099 = vunpack.c.l.b16 %v327
    %v1100 = vunpack.c.l.b16 %v328
    %v1101 = vunpack.c.l.b16 %v329
    %v1102 = vunpack.c.l.b16 %v330
    %v1103 = vunpack.c.l.b16 %v331
    %v1104 = vunpack.c.l.b16 %v332
    %v1105 = vunpack.c.l.b16 %v333
    %v1106 = vunpack.c.l.b16 %v334
    %v1107 = vunpack.c.l.b16 %v335
    %v1108 = vunpack.c.l.b16 %v336
    %v1109 = vunpack.c.l.b16 %v337
    %v1110 = vunpack.c.l.b16 %v338
    %v1111 = vunpack.c.l.b16 %v339
    %v1112 = vunpack.c.l.b16 %v340
    %v1113 = vunpack.c.l.b16 %v341
    %v1114 = vunpack.c.l.b16 %v342
    %v1115 = vunpack.c.l.b16 %v343
    %v1116 = vunpack.c.l.b16 %v344
    %v1117 = vunpack.c.l.b16 %v345
    %v1118 = vunpack.c.l.b16 %v346
    %v1119 = vunpack.c.l.b16 %v347
    %v1120 = vunpack.c.l.b16 %v348
    %v1121 = vunpack.c.l.b16 %v349
    %v1122 = vunpack.c.l.b16 %v350
    %v1123 = vunpack.c.l.b16 %v351
    %v1124 = vunpack.c.l.b16 %v352
    %v1125 = vunpack.c.l.b16 %v353
    %v1126 = vunpack.c.l.b16 %v354
    %v1127 = vunpack.c.l.b16 %v355
    %v1128 = vunpack.c.l.b16 %v356
    %v1129 = vunpack.c.l.b16 %v357
    %v1130 = vunpack.c.l.b16 %v358
    %v1131 = vunpack.c.l.b16 %v359
    %v1132 = vunpack.c.l.b16 %v360
    %v1133 = vunpack.c.l.b16 %v361
    %v1134 = vunpack.c.l.b16 %v362
    %v1135 = vunpack.c.l.b16 %v363
    %v1136 = vunpack.c.l.b16 %v364
    %v1137 = vunpack.c.l.b16 %v365
    %v1138 = vunpack.c.l.b16 %v366
    %v1139 = vunpack.c.l.b16 %v367
    %v1140 = vunpack.c.l.b16 %v368
    %v1141 = vunpack.c.l.b16 %v369
    %v1142 = vunpack.c.l.b16 %v370
    %v1143 = vunpack.c.l.b16 %v371
    %v1144 = vunpack.c.l.b16 %v372
    %v1145 = vunpack.c.l.b16 %v373
    %v1146 = vunpack.c.l.b16 %v374
    %v1147 = vunpack.c.l.b16 %v375
    %v1148 = vunpack.c.l.b16 %v376
    %v1149 = vunpack.c.l.b16 %v377
    %v1150 = vunpack.c.l.b16 %v378
    %v1151 = vunpack.c.l.b16 %v379
    %v1152 = vunpack.c.l.b16 %v380
    %v1153 = vunpack.c.l.b16 %v381
    %v1154 = vunpack.c.l.b16 %v382
    %v1155 = vunpack.c.l.b16 %v383
    %v1156 = vunpack.c.l.b16 %v384
    %v1157 = vunpack.c.l.b16 %v385
    %v1158 = vunpack.c.l.b16 %v386
    %v1159 = vunpack.c.l.b16 %v387
    %v1160 = vunpack.c.l.b16 %v388
    %v1161 = vunpack.c.l.b16 %v389
    %v1162 = vunpack.c.l.b16 %v390
    %v1163 = vunpack.c.l.b16 %v391
    %v1164 = vunpack.c.l.b16 %v392
    %v1165 = vunpack.c.l.b16 %v393
    %v1166 = vunpack.c.l.b16 %v394
    %v1167 = vunpack.c.l.b16 %v395
    %v1168 = vunpack.c.l.b16 %v396
    %v1169 = vunpack.c.l.b16 %v397
    %v1170 = vunpack.c.l.b16 %v398
    %v1171 = vunpack.c.l.b16 %v399
    %v1172 = vunpack.c.l.b16 %v400
    %v1173 = vunpack.c.l.b16 %v401
    %v1174 = vunpack.c.l.b16 %v402
    %v1175 = vunpack.c.l.b16 %v403
    %v1176 = vunpack.c.l.b16 %v404
    %v1177 = vunpack.c.l.b16 %v405
    %v1178 = vunpack.c.l.b16 %v406
    %v1179 = vunpack.c.l.b16 %v407
    %v1180 = vunpack.c.l.b16 %v408
    %v1181 = vunpack.c.l.b16 %v409
    %v1182 = vunpack.c.l.b16 %v410
    %v1183 = vunpack.c.l.b16 %v411
    %v1184 = vunpack.c.l.b16 %v412
    %v1185 = vunpack.c.l.b16 %v413
    %v1186 = vunpack.c.l.b16 %v414
    %v1187 = vunpack.c.l.b16 %v415
    %v1188 = vunpack.c.l.b16 %v416
    %v1189 = vunpack.c.l.b16 %v417
    %v1190 = vunpack.c.l.b16 %v418
    %v1191 = vunpack.c.l.b16 %v419
    %v1192 = vunpack.c.l.b16 %v420
    %v1193 = vunpack.c.l.b16 %v421
    %v1194 = vunpack.c.l.b16 %v422
    %v1195 = vunpack.c.l.b16 %v423
    %v1196 = vunpack.c.l.b16 %v424
    %v1197 = vunpack.c.l.b16 %v425
    %v1198 = vunpack.c.l.b16 %v426
    %v1199 = vunpack.c.l.b16 %v427
    %v1200 = vunpack.c.l.b16 %v428
    %v1201 = vunpack.c.l.b16 %v429
    %v1202 = vunpack.c.l.b16 %v430
    %v1203 = vunpack.c.l.b16 %v431
    %v1204 = vunpack.c.l.b16 %v432
    %v1205 = vunpack.c.l.b16 %v433
    %v1206 = vunpack.c.l.b16 %v434
    %v1207 = vunpack.c.l.b16 %v435
    %v1208 = vunpack.c.l.b16 %v436
    %v1209 = vunpack.c.l.b16 %v437
    %v1210 = vunpack.c.l.b16 %v438
    %v1211 = vunpack.c.l.b16 %v439
    %v1212 = vunpack.c.l.b16 %v440
    %v1213 = vunpack.c.l.b16 %v441
    %v1214 = vunpack.c.l.b16 %v442
    %v1215 = vunpack.c.l.b16 %v443
    %v1216 = vunpack.c.l.b16 %v444
    %v1217 = vunpack.c.l.b16 %v445
    %v1218 = vunpack.c.l.b16 %v446
    %v1219 = vunpack.c.l.b16 %v447
    %v1220 = vunpack.c.l.b16 %v448
    %v1221 = vunpack.c.l.b16 %v449
    %v1222 = vunpack.c.l.b16 %v450
    %v1223 = vunpack.c.l.b16 %v451
    %v1224 = vunpack.c.l.b16 %v452
    %v1225 = vunpack.c.l.b16 %v453
    %v1226 = vunpack.c.l.b16 %v454
    %v1227 = vunpack.c.l.b16 %v455
    %v1228 = vunpack.c.l.b16 %v456
    %v1229 = vunpack.c.l.b16 %v457
    %v1230 = vunpack.c.l.b16 %v458
    %v1231 = vunpack.c.l.b16 %v459
    %v1232 = vunpack.c.l.b16 %v460
    %v1233 = vunpack.c.l.b16 %v461
    %v1234 = vunpack.c.l.b16 %v462
    %v1235 = vunpack.c.l.b16 %v463
    %v1236 = vunpack.c.l.b16 %v464
    %v1237 = vunpack.c.l.b16 %v465
    %v1238 = vunpack.c.l.b16 %v466
    %v1239 = vunpack.c.l.b16 %v467
    %v1240 = vunpack.c.l.b16 %v468
    %v1241 = vunpack.c.l.b16 %v469
    %v1242 = vunpack.c.l.b16 %v470
    %v1243 = vunpack.c.l.b16 %v471
    %v1244 = vunpack.c.l.b16 %v472
    %v1245 = vunpack.c.l.b16 %v473
    %v1246 = vunpack.c.l.b16 %v474
    %v1247 = vunpack.c.l.b16 %v475
    %v1248 = vunpack.c.l.b16 %v476
    %v1249 = vunpack.c.l.b16 %v477
    %v1250 = vunpack.c.l.b16 %v478
    %v1251 = vunpack.c.l.b16 %v479
    %v1252 = vunpack.c.l.b16 %v480
    %v1253 = vunpack.c.l.b16 %v481
    %v1254 = vunpack.c.l.b16 %v482
    %v1255 = vunpack.c.l.b16 %v483
    %v1256 = vunpack.c.l.b16 %v484
    %v1257 = vunpack.c.l.b16 %v485
    %v1258 = vunpack.c.l.b16 %v486
    %v1259 = vunpack.c.l.b16 %v487
    %v1260 = vunpack.c.l.b16 %v488
    %v1261 = vunpack.c.l.b16 %v489
    %v1262 = vunpack.c.l.b16 %v490
    %v1263 = vunpack.c.l.b16 %v491
    %v1264 = vunpack.c.l.b16 %v492
    %v1265 = vunpack.c.l.b16 %v493
    %v1266 = vunpack.c.l.b16 %v494
    %v1267 = vunpack.c.l.b16 %v495
    %v1268 = vunpack.c.l.b16 %v496
    %v1269 = vunpack.c.l.b16 %v497
    %v1270 = vunpack.c.l.b16 %v498
    %v1271 = vunpack.c.l.b16 %v499
    %v1272 = vunpack.c.l.b16 %v500
    %v1273 = vunpack.c.l.b16 %v501
    %v1274 = vunpack.c.l.b16 %v502
    %v1275 = vunpack.c.l.b16 %v503
    %v1276 = vunpack.c.l.b16 %v504
    %v1277 = vunpack.c.l.b16 %v505
    %v1278 = vunpack.c.l.b16 %v506
    %v1279 = vunpack.c.l.b16 %v507
    %v1280 = vunpack.c.l.b16 %v508
    %v1281 = vunpack.c.l.b16 %v509
    %v1282 = vunpack.c.l.b16 %v510
    %v1283 = vunpack.c.l.b16 %v511
    %v1284 = vunpack.c.l.b16 %v512
    %v1285 = vunpack.c.l.b16 %v513
    %v1286 = vunpack.c.l.b16 %v514
    %v1287 = vunpack.c.l.b16 %v515
    %v1288 = vunpack.c.l.b16 %v516
    %v1289 = vunpack.c.l.b16 %v517
    %v1290 = vunpack.c.l.b16 %v518
    %v1291 = vunpack.c.l.b16 %v519
    %v1292 = vunpack.c.l.b16 %v520
    %v1293 = vunpack.c.l.b16 %v521
    %v1294 = vunpack.c.l.b16 %v522
    %v1295 = vunpack.c.l.b16 %v523
    %v1296 = vunpack.c.l.b16 %v524
    %v1297 = vunpack.c.l.b16 %v525
    %v1298 = vunpack.c.l.b16 %v526
    %v1299 = vunpack.c.l.b16 %v527
    %v1300 = vunpack.c.l.b16 %v528
    %v1301 = vunpack.c.l.b16 %v529
    %v1302 = vunpack.c.l.b16 %v530
    %v1303 = vunpack.c.l.b16 %v531
    %v1304 = vunpack.c.l.b16 %v532
    %v1305 = vunpack.c.l.b16 %v533
    %v1306 = vunpack.c.l.b16 %v534
    %v1307 = vunpack.c.l.b16 %v535
    %v1308 = vunpack.c.l.b16 %v536
    %v1309 = vunpack.c.l.b16 %v537
    %v1310 = vunpack.c.l.b16 %v538
    %v1311 = vunpack.c.l.b16 %v539
    %v1312 = vunpack.c.l.b16 %v540
    %v1313 = vunpack.c.l.b16 %v541
    %v1314 = vunpack.c.l.b16 %v542
    %v1315 = vunpack.c.l.b16 %v543
    %v1316 = vunpack.c.l.b16 %v544
    %v1317 = vunpack.c.l.b16 %v545
    %v1318 = vunpack.c.l.b16 %v546
    %v1319 = vunpack.c.l.b16 %v547
    %v1320 = vunpack.c.l.b16 %v548
    %v1321 = vunpack.c.l.b16 %v549
    %v1322 = vunpack.c.l.b16 %v550
    %v1323 = vunpack.c.l.b16 %v551
    %v1324 = vunpack.c.l.b16 %v552
    %v1325 = vunpack.c.l.b16 %v553
    %v1326 = vunpack.c.l.b16 %v554
    %v1327 = vunpack.c.l.b16 %v555
    %v1328 = vunpack.c.l.b16 %v556
    %v1329 = vunpack.c.l.b16 %v557
    %v1330 = vunpack.c.l.b16 %v558
    %v1331 = vunpack.c.l.b16 %v559
    %v1332 = vunpack.c.l.b16 %v560
    %v1333 = vunpack.c.l.b16 %v561
    %v1334 = vunpack.c.l.b16 %v562
    %v1335 = vunpack.c.l.b16 %v563
    %v1336 = vunpack.c.l.b16 %v564
    %v1337 = vunpack.c.l.b16 %v565
    %v1338 = vunpack.c.l.b16 %v566
    %v1339 = vunpack.c.l.b16 %v567
    %v1340 = vunpack.c.l.b16 %v568
    %v1341 = vunpack.c.l.b16 %v569
    %v1342 = vunpack.c.l.b16 %v570
    %v1343 = vunpack.c.l.b16 %v571
    %v1344 = vunpack.c.l.b16 %v572
    %v1345 = vunpack.c.l.b16 %v573
    %v1346 = vunpack.c.l.b16 %v574
    %v1347 = vunpack.c.l.b16 %v575
    %v1348 = vunpack.c.l.b16 %v576
    %v1349 = vunpack.c.l.b16 %v577
    %v1350 = vunpack.c.l.b16 %v578
    %v1351 = vunpack.c.l.b16 %v579
    %v1352 = vunpack.c.l.b16 %v580
    %v1353 = vunpack.c.l.b16 %v581
    %v1354 = vunpack.c.l.b16 %v582
    %v1355 = vunpack.c.l.b16 %v583
    %v1356 = vunpack.c.l.b16 %v584
    %v1357 = vunpack.c.l.b16 %v585
    %v1358 = vunpack.c.l.b16 %v586
    %v1359 = vunpack.c.l.b16 %v587
    %v1360 = vunpack.c.l.b16 %v588
    %v1361 = vunpack.c.l.b16 %v589
    %v1362 = vunpack.c.l.b16 %v590
    %v1363 = vunpack.c.l.b16 %v591
    %v1364 = vunpack.c.l.b16 %v592
    %v1365 = vunpack.c.l.b16 %v593
    %v1366 = vunpack.c.l.b16 %v594
    %v1367 = vunpack.c.l.b16 %v595
    %v1368 = vunpack.c.l.b16 %v596
    %v1369 = vunpack.c.l.b16 %v597
    %v1370 = vunpack.c.l.b16 %v598
    %v1371 = vunpack.c.l.b16 %v599
    %v1372 = vunpack.c.l.b16 %v600
    %v1373 = vunpack.c.l.b16 %v601
    %v1374 = vunpack.c.l.b16 %v602
    %v1375 = vunpack.c.l.b16 %v603
    %v1376 = vunpack.c.l.b16 %v604
    %v1377 = vunpack.c.l.b16 %v605
    %v1378 = vunpack.c.l.b16 %v606
    %v1379 = vunpack.c.l.b16 %v607
    %v1380 = vunpack.c.l.b16 %v608
    %v1381 = vunpack.c.l.b16 %v609
    %v1382 = vunpack.c.l.b16 %v610
    %v1383 = vunpack.c.l.b16 %v611
    %v1384 = vunpack.c.l.b16 %v612
    %v1385 = vunpack.c.l.b16 %v613
    %v1386 = vunpack.c.l.b16 %v614
    %v1387 = vunpack.c.l.b16 %v615
    %v1388 = vunpack.c.l.b16 %v616
    %v1389 = vunpack.c.l.b16 %v617
    %v1390 = vunpack.c.l.b16 %v618
    %v1391 = vunpack.c.l.b16 %v619
    %v1392 = vunpack.c.l.b16 %v620
    %v1393 = vunpack.c.l.b16 %v621
    %v1394 = vunpack.c.l.b16 %v622
    %v1395 = vunpack.c.l.b16 %v623
    %v1396 = vunpack.c.l.b16 %v624
    %v1397 = vunpack.c.l.b16 %v625
    %v1398 = vunpack.c.l.b16 %v626
    %v1399 = vunpack.c.l.b16 %v627
    %v1400 = vunpack.c.l.b16 %v628
    %v1401 = vunpack.c.l.b16 %v629
    %v1402 = vunpack.c.l.b16 %v630
    %v1403 = vunpack.c.l.b16 %v631
    %v1404 = vunpack.c.l.b16 %v632
    %v1405 = vunpack.c.l.b16 %v633
    %v1406 = vunpack.c.l.b16 %v634
    %v1407 = vunpack.c.l.b16 %v635
    %v1408 = vunpack.c.l.b16 %v636
    %v1409 = vunpack.c.l.b16 %v637
    %v1410 = vunpack.c.l.b16 %v638
    %v1411 = vunpack.c.l.b16 %v639
    %v1412 = vunpack.c.l.b16 %v640
    %v1413 = vunpack.c.l.b16 %v641
    %v1414 = vunpack.c.l.b16 %v642
    %v1415 = vunpack.c.l.b16 %v643
    %v1416 = vunpack.c.l.b16 %v644
    %v1417 = vunpack.c.l.b16 %v645
    %v1418 = vunpack.c.l.b16 %v646
    %v1419 = vunpack.c.l.b16 %v647
    %v1420 = vunpack.c.l.b16 %v648
    %v1421 = vunpack.c.l.b16 %v649
    %v1422 = vunpack.c.l.b16 %v650
    %v1423 = vunpack.c.l.b16 %v651
    %v1424 = vunpack.c.l.b16 %v652
    %v1425 = vunpack.c.l.b16 %v653
    %v1426 = vunpack.c.l.b16 %v654
    %v1427 = vunpack.c.l.b16 %v655
    %v1428 = vunpack.c.l.b16 %v656
    %v1429 = vunpack.c.l.b16 %v657
    %v1430 = vunpack.c.l.b16 %v658
    %v1431 = vunpack.c.l.b16 %v659
    %v1432 = vunpack.c.l.b16 %v660
    %v1433 = vunpack.c.l.b16 %v661
    %v1434 = vunpack.c.l.b16 %v662
    %v1435 = vunpack.c.l.b16 %v663
    %v1436 = vunpack.c.l.b16 %v664
    %v1437 = vunpack.c.l.b16 %v665
    %v1438 = vunpack.c.l.b16 %v666
    %v1439 = vunpack.c.l.b16 %v667
    %v1440 = vunpack.c.l.b16 %v668
    %v1441 = vunpack.c.l.b16 %v669
    %v1442 = vunpack.c.l.b16 %v670
    %v1443 = vunpack.c.l.b16 %v671
    %v1444 = vunpack.c.l.b16 %v672
    %v1445 = vunpack.c.l.b16 %v673
    %v1446 = vunpack.c.l.b16 %v674
    %v1447 = vunpack.c.l.b16 %v675
    %v1448 = vunpack.c.l.b16 %v676
    %v1449 = vunpack.c.l.b16 %v677
    %v1450 = vunpack.c.l.b16 %v678
    %v1451 = vunpack.c.l.b16 %v679
    %v1452 = vunpack.c.l.b16 %v680
    %v1453 = vunpack.c.l.b16 %v681
    %v1454 = vpack.c.b16 %v1071, %v1070
    %v1455 = vpack.c.b16 %v1073, %v1072
    %v1456 = vpack.c.b16 %v1075, %v1074
    %v1457 = vpack.c.b16 %v1077, %v1076
    %v1458 = vpack.c.b16 %v1079, %v1078
    %v1459 = vpack.c.b16 %v1081, %v1080
    %v1460 = vpack.c.b16 %v1083, %v1082
    %v1461 = vpack.c.b16 %v1085, %v1084
    %v1462 = vpack.c.b16 %v1087, %v1086
    %v1463 = vpack.c.b16 %v1089, %v1088
    %v1464 = vpack.c.b16 %v1091, %v1090
    %v1465 = vpack.c.b16 %v1093, %v1092
    %v1466 = vpack.c.b16 %v1095, %v1094
    %v1467 = vpack.c.b16 %v1097, %v1096
    %v1468 = vpack.c.b16 %v1099, %v1098
    %v1469 = vpack.c.b16 %v1101, %v1100
    %v1470 = vpack.c.b16 %v1103, %v1102
    %v1471 = vpack.c.b16 %v1105, %v1104
    %v1472 = vpack.c.b16 %v1107, %v1106
    %v1473 = vpack.c.b16 %v1109, %v1108
    %v1474 = vpack.c.b16 %v1111, %v1110
    %v1475 = vpack.c.b16 %v1113, %v1112
    %v1476 = vpack.c.b16 %v1115, %v1114
    %v1477 = vpack.c.b16 %v1117, %v1116
    %v1478 = vpack.c.b16 %v1119, %v1118
    %v1479 = vpack.c.b16 %v1121, %v1120
    %v1480 = vpack.c.b16 %v1123, %v1122
    %v1481 = vpack.c.b16 %v1125, %v1124
    %v1482 = vpack.c.b16 %v1127, %v1126
    %v1483 = vpack.c.b16 %v1129, %v1128
    %v1484 = vpack.c.b16 %v1131, %v1130
    %v1485 = vpack.c.b16 %v1133, %v1132
    %v1486 = vpack.c.b16 %v1135, %v1134
    %v1487 = vpack.c.b16 %v1137, %v1136
    %v1488 = vpack.c.b16 %v1139, %v1138
    %v1489 = vpack.c.b16 %v1141, %v1140
    %v1490 = vpack.c.b16 %v1143, %v1142
    %v1491 = vpack.c.b16 %v1145, %v1144
    %v1492 = vpack.c.b16 %v1147, %v1146
    %v1493 = vpack.c.b16 %v1149, %v1148
    %v1494 = vpack.c.b16 %v1151, %v1150
    %v1495 = vpack.c.b16 %v1153, %v1152
    %v1496 = vpack.c.b16 %v1155, %v1154
    %v1497 = vpack.c.b16 %v1157, %v1156
    %v1498 = vpack.c.b16 %v1159, %v1158
    %v1499 = vpack.c.b16 %v1161, %v1160
    %v1500 = vpack.c.b16 %v1163, %v1162
    %v1501 = vpack.c.b16 %v1165, %v1164
    %v1502 = vpack.c.b16 %v1167, %v1166
    %v1503 = vpack.c.b16 %v1169, %v1168
    %v1504 = vpack.c.b16 %v1171, %v1170
    %v1505 = vpack.c.b16 %v1173, %v1172
    %v1506 = vpack.c.b16 %v1175, %v1174
    %v1507 = vpack.c.b16 %v1177, %v1176
    %v1508 = vpack.c.b16 %v1179, %v1178
    %v1509 = vpack.c.b16 %v1181, %v1180
    %v1510 = vpack.c.b16 %v1183, %v1182
    %v1511 = vpack.c.b16 %v1185, %v1184
    %v1512 = vpack.c.b16 %v1187, %v1186
    %v1513 = vpack.c.b16 %v1189, %v1188
    %v1514 = vpack.c.b16 %v1191, %v1190
    %v1515 = vpack.c.b16 %v1193, %v1192
    %v1516 = vpack.c.b16 %v1195, %v1194
    %v1517 = vpack.c.b16 %v1197, %v1196
    %v1518 = vpack.c.b16 %v1199, %v1198
    %v1519 = vpack.c.b16 %v1201, %v1200
    %v1520 = vpack.c.b16 %v1203, %v1202
    %v1521 = vpack.c.b16 %v1205, %v1204
    %v1522 = vpack.c.b16 %v1207, %v1206
    %v1523 = vpack.c.b16 %v1209, %v1208
    %v1524 = vpack.c.b16 %v1211, %v1210
    %v1525 = vpack.c.b16 %v1213, %v1212
    %v1526 = vpack.c.b16 %v1215, %v1214
    %v1527 = vpack.c.b16 %v1217, %v1216
    %v1528 = vpack.c.b16 %v1219, %v1218
    %v1529 = vpack.c.b16 %v1221, %v1220
    %v1530 = vpack.c.b16 %v1223, %v1222
    %v1531 = vpack.c.b16 %v1225, %v1224
    %v1532 = vpack.c.b16 %v1227, %v1226
    %v1533 = vpack.c.b16 %v1229, %v1228
    %v1534 = vpack.c.b16 %v1231, %v1230
    %v1535 = vpack.c.b16 %v1233, %v1232
    %v1536 = vpack.c.b16 %v1235, %v1234
    %v1537 = vpack.c.b16 %v1237, %v1236
    %v1538 = vpack.c.b16 %v1239, %v1238
    %v1539 = vpack.c.b16 %v1241, %v1240
    %v1540 = vpack.c.b16 %v1243, %v1242
    %v1541 = vpack.c.b16 %v1245, %v1244
    %v1542 = vpack.c.b16 %v1247, %v1246
    %v1543 = vpack.c.b16 %v1249, %v1248
    %v1544 = vpack.c.b16 %v1251, %v1250
    %v1545 = vpack.c.b16 %v1253, %v1252
    %v1546 = vpack.c.b16 %v1255, %v1254
    %v1547 = vpack.c.b16 %v1257, %v1256
    %v1548 = vpack.c.b16 %v1259, %v1258
    %v1549 = vpack.c.b16 %v1261, %v1260
    %v1550 = vpack.c.b16 %v1263, %v1262
    %v1551 = vpack.c.b16 %v1265, %v1264
    %v1552 = vpack.c.b16 %v1267, %v1266
    %v1553 = vpack.c.b16 %v1269, %v1268
    %v1554 = vpack.c.b16 %v1271, %v1270
    %v1555 = vpack.c.b16 %v1273, %v1272
    %v1556 = vpack.c.b16 %v1275, %v1274
    %v1557 = vpack.c.b16 %v1277, %v1276
    %v1558 = vpack.c.b16 %v1279, %v1278
    %v1559 = vpack.c.b16 %v1281, %v1280
    %v1560 = vpack.c.b16 %v1283, %v1282
    %v1561 = vpack.c.b16 %v1285, %v1284
    %v1562 = vpack.c.b16 %v1287, %v1286
    %v1563 = vpack.c.b16 %v1289, %v1288
    %v1564 = vpack.c.b16 %v1291, %v1290
    %v1565 = vpack.c.b16 %v1293, %v1292
    %v1566 = vpack.c.b16 %v1295, %v1294
    %v1567 = vpack.c.b16 %v1297, %v1296
    %v1568 = vpack.c.b16 %v1299, %v1298
    %v1569 = vpack.c.b16 %v1301, %v1300
    %v1570 = vpack.c.b16 %v1303, %v1302
    %v1571 = vpack.c.b16 %v1305, %v1304
    %v1572 = vpack.c.b16 %v1307, %v1306
    %v1573 = vpack.c.b16 %v1309, %v1308
    %v1574 = vpack.c.b16 %v1311, %v1310
    %v1575 = vpack.c.b16 %v1313, %v1312
    %v1576 = vpack.c.b16 %v1315, %v1314
    %v1577 = vpack.c.b16 %v1317, %v1316
    %v1578 = vpack.c.b16 %v1319, %v1318
    %v1579 = vpack.c.b16 %v1321, %v1320
    %v1580 = vpack.c.b16 %v1323, %v1322
    %v1581 = vpack.c.b16 %v1325, %v1324
    %v1582 = vpack.c.b16 %v1327, %v1326
    %v1583 = vpack.c.b16 %v1329, %v1328
    %v1584 = vpack.c.b16 %v1331, %v1330
    %v1585 = vpack.c.b16 %v1333, %v1332
    %v1586 = vpack.c.b16 %v1335, %v1334
    %v1587 = vpack.c.b16 %v1337, %v1336
    %v1588 = vpack.c.b16 %v1339, %v1338
    %v1589 = vpack.c.b16 %v1341, %v1340
    %v1590 = vpack.c.b16 %v1343, %v1342
    %v1591 = vpack.c.b16 %v1345, %v1344
    %v1592 = vpack.c.b16 %v1347, %v1346
    %v1593 = vpack.c.b16 %v1349, %v1348
    %v1594 = vpack.c.b16 %v1351, %v1350
    %v1595 = vpack.c.b16 %v1353, %v1352
    %v1596 = vpack.c.b16 %v1355, %v1354
    %v1597 = vpack.c.b16 %v1357, %v1356
    %v1598 = vpack.c.b16 %v1359, %v1358
    %v1599 = vpack.c.b16 %v1361, %v1360
    %v1600 = vpack.c.b16 %v1363, %v1362
    %v1601 = vpack.c.b16 %v1365, %v1364
    %v1602 = vpack.c.b16 %v1367, %v1366
    %v1603 = vpack.c.b16 %v1369, %v1368
    %v1604 = vpack.c.b16 %v1371, %v1370
    %v1605 = vpack.c.b16 %v1373, %v1372
    %v1606 = vpack.c.b16 %v1375, %v1374
    %v1607 = vpack.c.b16 %v1377, %v1376
    %v1608 = vpack.c.b16 %v1379, %v1378
    %v1609 = vpack.c.b16 %v1381, %v1380
    %v1610 = vpack.c.b16 %v1383, %v1382
    %v1611 = vpack.c.b16 %v1385, %v1384
    %v1612 = vpack.c.b16 %v1387, %v1386
    %v1613 = vpack.c.b16 %v1389, %v1388
    %v1614 = vpack.c.b16 %v1391, %v1390
    %v1615 = vpack.c.b16 %v1393, %v1392
    %v1616 = vpack.c.b16 %v1395, %v1394
    %v1617 = vpack.c.b16 %v1397, %v1396
    %v1618 = vpack.c.b16 %v1399, %v1398
    %v1619 = vpack.c.b16 %v1401, %v1400
    %v1620 = vpack.c.b16 %v1403, %v1402
    %v1621 = vpack.c.b16 %v1405, %v1404
    %v1622 = vpack.c.b16 %v1407, %v1406
    %v1623 = vpack.c.b16 %v1409, %v1408
    %v1624 = vpack.c.b16 %v1411, %v1410
    %v1625 = vpack.c.b16 %v1413, %v1412
    %v1626 = vpack.c.b16 %v1415, %v1414
    %v1627 = vpack.c.b16 %v1417, %v1416
    %v1628 = vpack.c.b16 %v1419, %v1418
    %v1629 = vpack.c.b16 %v1421, %v1420
    %v1630 = vpack.c.b16 %v1423, %v1422
    %v1631 = vpack.c.b16 %v1425, %v1424
    %v1632 = vpack.c.b16 %v1427, %v1426
    %v1633 = vpack.c.b16 %v1429, %v1428
    %v1634 = vpack.c.b16 %v1431, %v1430
    %v1635 = vpack.c.b16 %v1433, %v1432
    %v1636 = vpack.c.b16 %v1435, %v1434
    %v1637 = vpack.c.b16 %v1437, %v1436
    %v1638 = vpack.c.b16 %v1439, %v1438
    %v1639 = vpack.c.b16 %v1441, %v1440
    %v1640 = vpack.c.b16 %v1443, %v1442
    %v1641 = vpack.c.b16 %v1445, %v1444
    %v1642 = vpack.c.b16 %v1447, %v1446
    %v1643 = vpack.c.b16 %v1449, %v1448
    %v1644 = vpack.c.b16 %v1451, %v1450
    %v1645 = vpack.c.b16 %v1453, %v1452
    %1838 = vmatpush.bf16.msra.mxu0 %v1461
    %1839 = vmatpush.bf16.msra.mxu0 %v1460
    %1840 = vmatpush.bf16.msra.mxu0 %v1459
    %1841 = vmatpush.bf16.msra.mxu0 %v1458
    %1842 = vmatpush.bf16.msra.mxu0 %v1457
    %1843 = vmatpush.bf16.msra.mxu0 %v1456
    %1844 = vmatpush.bf16.msra.mxu0 %v1455
    %1845 = vmatpush.bf16.msra.mxu0 %v1454
    %1846 = vmatmul.bf16.gmra.mxu0 %v274
    %v1847 = vpop.f32.mrf.mxu0
    %v1848 = vadd.f32 %v684, %v1847
    %v1849 = vpop.f32.mrf.mxu0
    %v1850 = vadd.f32 %v684, %v1849
    %1851 = vdwg.mxu0
    %1852 = vmatpush.bf16.msra.mxu0 %v1469
    %1853 = vmatpush.bf16.msra.mxu0 %v1468
    %1854 = vmatpush.bf16.msra.mxu0 %v1467
    %1855 = vmatpush.bf16.msra.mxu0 %v1466
    %1856 = vmatpush.bf16.msra.mxu0 %v1465
    %1857 = vmatpush.bf16.msra.mxu0 %v1464
    %1858 = vmatpush.bf16.msra.mxu0 %v1463
    %1859 = vmatpush.bf16.msra.mxu0 %v1462
    %1860 = vmatmul.bf16.gmra.mxu0 %v275
    %v1861 = vpop.f32.mrf.mxu0
    %v1862 = vadd.f32 %v1848, %v1861
    %v1863 = vpop.f32.mrf.mxu0
    %v1864 = vadd.f32 %v1850, %v1863
    %1865 = vdwg.mxu0
    %1866 = vmatpush.bf16.msra.mxu0 %v1477
    %1867 = vmatpush.bf16.msra.mxu0 %v1476
    %1868 = vmatpush.bf16.msra.mxu0 %v1475
    %1869 = vmatpush.bf16.msra.mxu0 %v1474
    %1870 = vmatpush.bf16.msra.mxu0 %v1473
    %1871 = vmatpush.bf16.msra.mxu0 %v1472
    %1872 = vmatpush.bf16.msra.mxu0 %v1471
    %1873 = vmatpush.bf16.msra.mxu0 %v1470
    %1874 = vmatmul.bf16.gmra.mxu0 %v276
    %v1875 = vpop.f32.mrf.mxu0
    %v1876 = vadd.f32 %v1862, %v1875
    %v1877 = vpop.f32.mrf.mxu0
    %v1878 = vadd.f32 %v1864, %v1877
    %1879 = vdwg.mxu0
    %1880 = vmatpush.bf16.msra.mxu0 %v1485
    %1881 = vmatpush.bf16.msra.mxu0 %v1484
    %1882 = vmatpush.bf16.msra.mxu0 %v1483
    %1883 = vmatpush.bf16.msra.mxu0 %v1482
    %1884 = vmatpush.bf16.msra.mxu0 %v1481
    %1885 = vmatpush.bf16.msra.mxu0 %v1480
    %1886 = vmatpush.bf16.msra.mxu0 %v1479
    %1887 = vmatpush.bf16.msra.mxu0 %v1478
    %1888 = vmatmul.bf16.gmra.mxu0 %v277
    %v1889 = vpop.f32.mrf.mxu0
    %v1890 = vadd.f32 %v1876, %v1889
    %v1891 = vpop.f32.mrf.mxu0
    %v1892 = vadd.f32 %v1878, %v1891
    %1893 = vdwg.mxu0
    %1894 = vmatpush.bf16.msra.mxu0 %v1493
    %1895 = vmatpush.bf16.msra.mxu0 %v1492
    %1896 = vmatpush.bf16.msra.mxu0 %v1491
    %1897 = vmatpush.bf16.msra.mxu0 %v1490
    %1898 = vmatpush.bf16.msra.mxu0 %v1489
    %1899 = vmatpush.bf16.msra.mxu0 %v1488
    %1900 = vmatpush.bf16.msra.mxu0 %v1487
    %1901 = vmatpush.bf16.msra.mxu0 %v1486
    %1902 = vmatmul.bf16.gmra.mxu0 %v278
    %v1903 = vpop.f32.mrf.mxu0
    %v1904 = vadd.f32 %v1890, %v1903
    %v1905 = vpop.f32.mrf.mxu0
    %v1906 = vadd.f32 %v1892, %v1905
    %1907 = vdwg.mxu0
    %1908 = vmatpush.bf16.msra.mxu0 %v1501
    %1909 = vmatpush.bf16.msra.mxu0 %v1500
    %1910 = vmatpush.bf16.msra.mxu0 %v1499
    %1911 = vmatpush.bf16.msra.mxu0 %v1498
    %1912 = vmatpush.bf16.msra.mxu0 %v1497
    %1913 = vmatpush.bf16.msra.mxu0 %v1496
    %1914 = vmatpush.bf16.msra.mxu0 %v1495
    %1915 = vmatpush.bf16.msra.mxu0 %v1494
    %1916 = vmatmul.bf16.gmra.mxu0 %v279
    %v1917 = vpop.f32.mrf.mxu0
    %v1918 = vadd.f32 %v1904, %v1917
    %v1919 = vpop.f32.mrf.mxu0
    %v1920 = vadd.f32 %v1906, %v1919
    %1921 = vdwg.mxu0
    %1922 = vmatpush.bf16.msra.mxu0 %v1509
    %1923 = vmatpush.bf16.msra.mxu0 %v1508
    %1924 = vmatpush.bf16.msra.mxu0 %v1507
    %1925 = vmatpush.bf16.msra.mxu0 %v1506
    %1926 = vmatpush.bf16.msra.mxu0 %v1505
    %1927 = vmatpush.bf16.msra.mxu0 %v1504
    %1928 = vmatpush.bf16.msra.mxu0 %v1503
    %1929 = vmatpush.bf16.msra.mxu0 %v1502
    %1930 = vmatmul.bf16.gmra.mxu0 %v280
    %v1931 = vpop.f32.mrf.mxu0
    %v1932 = vadd.f32 %v1918, %v1931
    %v1933 = vpop.f32.mrf.mxu0
    %v1934 = vadd.f32 %v1920, %v1933
    %1935 = vdwg.mxu0
    %1936 = vmatpush.bf16.msra.mxu0 %v1517
    %1937 = vmatpush.bf16.msra.mxu0 %v1516
    %1938 = vmatpush.bf16.msra.mxu0 %v1515
    %1939 = vmatpush.bf16.msra.mxu0 %v1514
    %1940 = vmatpush.bf16.msra.mxu0 %v1513
    %1941 = vmatpush.bf16.msra.mxu0 %v1512
    %1942 = vmatpush.bf16.msra.mxu0 %v1511
    %1943 = vmatpush.bf16.msra.mxu0 %v1510
    %1944 = vmatmul.bf16.gmra.mxu0 %v281
    %v1945 = vpop.f32.mrf.mxu0
    %v1946 = vadd.f32 %v1932, %v1945
    %v1947 = vpop.f32.mrf.mxu0
    %v1948 = vadd.f32 %v1934, %v1947
    %1949 = vdwg.mxu0
    %1950 = vmatpush.bf16.msra.mxu0 %v1525
    %1951 = vmatpush.bf16.msra.mxu0 %v1524
    %1952 = vmatpush.bf16.msra.mxu0 %v1523
    %1953 = vmatpush.bf16.msra.mxu0 %v1522
    %1954 = vmatpush.bf16.msra.mxu0 %v1521
    %1955 = vmatpush.bf16.msra.mxu0 %v1520
    %1956 = vmatpush.bf16.msra.mxu0 %v1519
    %1957 = vmatpush.bf16.msra.mxu0 %v1518
    %1958 = vmatmul.bf16.gmra.mxu0 %v282
    %v1959 = vpop.f32.mrf.mxu0
    %v1960 = vadd.f32 %v1946, %v1959
    %v1961 = vpop.f32.mrf.mxu0
    %v1962 = vadd.f32 %v1948, %v1961
    %1963 = vdwg.mxu0
    %1964 = vmatpush.bf16.msra.mxu0 %v1533
    %1965 = vmatpush.bf16.msra.mxu0 %v1532
    %1966 = vmatpush.bf16.msra.mxu0 %v1531
    %1967 = vmatpush.bf16.msra.mxu0 %v1530
    %1968 = vmatpush.bf16.msra.mxu0 %v1529
    %1969 = vmatpush.bf16.msra.mxu0 %v1528
    %1970 = vmatpush.bf16.msra.mxu0 %v1527
    %1971 = vmatpush.bf16.msra.mxu0 %v1526
    %1972 = vmatmul.bf16.gmra.mxu0 %v283
    %v1973 = vpop.f32.mrf.mxu0
    %v1974 = vadd.f32 %v1960, %v1973
    %v1975 = vpop.f32.mrf.mxu0
    %v1976 = vadd.f32 %v1962, %v1975
    %1977 = vdwg.mxu0
    %1978 = vmatpush.bf16.msra.mxu0 %v1541
    %1979 = vmatpush.bf16.msra.mxu0 %v1540
    %1980 = vmatpush.bf16.msra.mxu0 %v1539
    %1981 = vmatpush.bf16.msra.mxu0 %v1538
    %1982 = vmatpush.bf16.msra.mxu0 %v1537
    %1983 = vmatpush.bf16.msra.mxu0 %v1536
    %1984 = vmatpush.bf16.msra.mxu0 %v1535
    %1985 = vmatpush.bf16.msra.mxu0 %v1534
    %1986 = vmatmul.bf16.gmra.mxu0 %v284
    %v1987 = vpop.f32.mrf.mxu0
    %v1988 = vadd.f32 %v1974, %v1987
    %v1989 = vpop.f32.mrf.mxu0
    %v1990 = vadd.f32 %v1976, %v1989
    %1991 = vdwg.mxu0
    %1992 = vmatpush.bf16.msra.mxu0 %v1549
    %1993 = vmatpush.bf16.msra.mxu0 %v1548
    %1994 = vmatpush.bf16.msra.mxu0 %v1547
    %1995 = vmatpush.bf16.msra.mxu0 %v1546
    %1996 = vmatpush.bf16.msra.mxu0 %v1545
    %1997 = vmatpush.bf16.msra.mxu0 %v1544
    %1998 = vmatpush.bf16.msra.mxu0 %v1543
    %1999 = vmatpush.bf16.msra.mxu0 %v1542
    %2000 = vmatmul.bf16.gmra.mxu0 %v285
    %v2001 = vpop.f32.mrf.mxu0
    %v2002 = vadd.f32 %v1988, %v2001
    %v2003 = vpop.f32.mrf.mxu0
    %v2004 = vadd.f32 %v1990, %v2003
    %2005 = vdwg.mxu0
    %2006 = vmatpush.bf16.msra.mxu0 %v1557
    %2007 = vmatpush.bf16.msra.mxu0 %v1556
    %2008 = vmatpush.bf16.msra.mxu0 %v1555
    %2009 = vmatpush.bf16.msra.mxu0 %v1554
    %2010 = vmatpush.bf16.msra.mxu0 %v1553
    %2011 = vmatpush.bf16.msra.mxu0 %v1552
    %2012 = vmatpush.bf16.msra.mxu0 %v1551
    %2013 = vmatpush.bf16.msra.mxu0 %v1550
    %2014 = vmatmul.bf16.gmra.mxu0 %v286
    %v2015 = vpop.f32.mrf.mxu0
    %v2016 = vadd.f32 %v2002, %v2015
    %v2017 = vpop.f32.mrf.mxu0
    %v2018 = vadd.f32 %v2004, %v2017
    %2019 = vdwg.mxu0
    %2020 = vmatpush.bf16.msra.mxu0 %v1565
    %2021 = vmatpush.bf16.msra.mxu0 %v1564
    %2022 = vmatpush.bf16.msra.mxu0 %v1563
    %2023 = vmatpush.bf16.msra.mxu0 %v1562
    %2024 = vmatpush.bf16.msra.mxu0 %v1561
    %2025 = vmatpush.bf16.msra.mxu0 %v1560
    %2026 = vmatpush.bf16.msra.mxu0 %v1559
    %2027 = vmatpush.bf16.msra.mxu0 %v1558
    %2028 = vmatmul.bf16.gmra.mxu0 %v287
    %v2029 = vpop.f32.mrf.mxu0
    %v2030 = vadd.f32 %v2016, %v2029
    %v2031 = vpop.f32.mrf.mxu0
    %v2032 = vadd.f32 %v2018, %v2031
    %2033 = vdwg.mxu0
    %2034 = vmatpush.bf16.msra.mxu0 %v1573
    %2035 = vmatpush.bf16.msra.mxu0 %v1572
    %2036 = vmatpush.bf16.msra.mxu0 %v1571
    %2037 = vmatpush.bf16.msra.mxu0 %v1570
    %2038 = vmatpush.bf16.msra.mxu0 %v1569
    %2039 = vmatpush.bf16.msra.mxu0 %v1568
    %2040 = vmatpush.bf16.msra.mxu0 %v1567
    %2041 = vmatpush.bf16.msra.mxu0 %v1566
    %2042 = vmatmul.bf16.gmra.mxu0 %v288
    %v2043 = vpop.f32.mrf.mxu0
    %v2044 = vadd.f32 %v2030, %v2043
    %v2045 = vpop.f32.mrf.mxu0
    %v2046 = vadd.f32 %v2032, %v2045
    %2047 = vdwg.mxu0
    %2048 = vmatpush.bf16.msra.mxu0 %v1581
    %2049 = vmatpush.bf16.msra.mxu0 %v1580
    %2050 = vmatpush.bf16.msra.mxu0 %v1579
    %2051 = vmatpush.bf16.msra.mxu0 %v1578
    %2052 = vmatpush.bf16.msra.mxu0 %v1577
    %2053 = vmatpush.bf16.msra.mxu0 %v1576
    %2054 = vmatpush.bf16.msra.mxu0 %v1575
    %2055 = vmatpush.bf16.msra.mxu0 %v1574
    %2056 = vmatmul.bf16.gmra.mxu0 %v289
    %v2057 = vpop.f32.mrf.mxu0
    %v2058 = vadd.f32 %v2044, %v2057
    %v2059 = vpop.f32.mrf.mxu0
    %v2060 = vadd.f32 %v2046, %v2059
    %2061 = vdwg.mxu0
    %2062 = vmatpush.bf16.msra.mxu0 %v1589
    %2063 = vmatpush.bf16.msra.mxu0 %v1588
    %2064 = vmatpush.bf16.msra.mxu0 %v1587
    %2065 = vmatpush.bf16.msra.mxu0 %v1586
    %2066 = vmatpush.bf16.msra.mxu0 %v1585
    %2067 = vmatpush.bf16.msra.mxu0 %v1584
    %2068 = vmatpush.bf16.msra.mxu0 %v1583
    %2069 = vmatpush.bf16.msra.mxu0 %v1582
    %2070 = vmatmul.bf16.gmra.mxu0 %v290
    %v2071 = vpop.f32.mrf.mxu0
    %v2072 = vadd.f32 %v2058, %v2071
    %v2073 = vpop.f32.mrf.mxu0
    %v2074 = vadd.f32 %v2060, %v2073
    %2075 = vdwg.mxu0
    %2076 = vmatpush.bf16.msra.mxu0 %v1597
    %2077 = vmatpush.bf16.msra.mxu0 %v1596
    %2078 = vmatpush.bf16.msra.mxu0 %v1595
    %2079 = vmatpush.bf16.msra.mxu0 %v1594
    %2080 = vmatpush.bf16.msra.mxu0 %v1593
    %2081 = vmatpush.bf16.msra.mxu0 %v1592
    %2082 = vmatpush.bf16.msra.mxu0 %v1591
    %2083 = vmatpush.bf16.msra.mxu0 %v1590
    %2084 = vmatmul.bf16.gmra.mxu0 %v291
    %v2085 = vpop.f32.mrf.mxu0
    %v2086 = vadd.f32 %v2072, %v2085
    %v2087 = vpop.f32.mrf.mxu0
    %v2088 = vadd.f32 %v2074, %v2087
    %2089 = vdwg.mxu0
    %2090 = vmatpush.bf16.msra.mxu0 %v1605
    %2091 = vmatpush.bf16.msra.mxu0 %v1604
    %2092 = vmatpush.bf16.msra.mxu0 %v1603
    %2093 = vmatpush.bf16.msra.mxu0 %v1602
    %2094 = vmatpush.bf16.msra.mxu0 %v1601
    %2095 = vmatpush.bf16.msra.mxu0 %v1600
    %2096 = vmatpush.bf16.msra.mxu0 %v1599
    %2097 = vmatpush.bf16.msra.mxu0 %v1598
    %2098 = vmatmul.bf16.gmra.mxu0 %v292
    %v2099 = vpop.f32.mrf.mxu0
    %v2100 = vadd.f32 %v2086, %v2099
    %v2101 = vpop.f32.mrf.mxu0
    %v2102 = vadd.f32 %v2088, %v2101
    %2103 = vdwg.mxu0
    %2104 = vmatpush.bf16.msra.mxu0 %v1613
    %2105 = vmatpush.bf16.msra.mxu0 %v1612
    %2106 = vmatpush.bf16.msra.mxu0 %v1611
    %2107 = vmatpush.bf16.msra.mxu0 %v1610
    %2108 = vmatpush.bf16.msra.mxu0 %v1609
    %2109 = vmatpush.bf16.msra.mxu0 %v1608
    %2110 = vmatpush.bf16.msra.mxu0 %v1607
    %2111 = vmatpush.bf16.msra.mxu0 %v1606
    %2112 = vmatmul.bf16.gmra.mxu0 %v293
    %v2113 = vpop.f32.mrf.mxu0
    %v2114 = vadd.f32 %v2100, %v2113
    %v2115 = vpop.f32.mrf.mxu0
    %v2116 = vadd.f32 %v2102, %v2115
    %2117 = vdwg.mxu0
    %2118 = vmatpush.bf16.msra.mxu0 %v1621
    %2119 = vmatpush.bf16.msra.mxu0 %v1620
    %2120 = vmatpush.bf16.msra.mxu0 %v1619
    %2121 = vmatpush.bf16.msra.mxu0 %v1618
    %2122 = vmatpush.bf16.msra.mxu0 %v1617
    %2123 = vmatpush.bf16.msra.mxu0 %v1616
    %2124 = vmatpush.bf16.msra.mxu0 %v1615
    %2125 = vmatpush.bf16.msra.mxu0 %v1614
    %2126 = vmatmul.bf16.gmra.mxu0 %v294
    %v2127 = vpop.f32.mrf.mxu0
    %v2128 = vadd.f32 %v2114, %v2127
    %v2129 = vpop.f32.mrf.mxu0
    %v2130 = vadd.f32 %v2116, %v2129
    %2131 = vdwg.mxu0
    %2132 = vmatpush.bf16.msra.mxu0 %v1629
    %2133 = vmatpush.bf16.msra.mxu0 %v1628
    %2134 = vmatpush.bf16.msra.mxu0 %v1627
    %2135 = vmatpush.bf16.msra.mxu0 %v1626
    %2136 = vmatpush.bf16.msra.mxu0 %v1625
    %2137 = vmatpush.bf16.msra.mxu0 %v1624
    %2138 = vmatpush.bf16.msra.mxu0 %v1623
    %2139 = vmatpush.bf16.msra.mxu0 %v1622
    %2140 = vmatmul.bf16.gmra.mxu0 %v295
    %v2141 = vpop.f32.mrf.mxu0
    %v2142 = vadd.f32 %v2128, %v2141
    %v2143 = vpop.f32.mrf.mxu0
    %v2144 = vadd.f32 %v2130, %v2143
    %2145 = vdwg.mxu0
    %2146 = vmatpush.bf16.msra.mxu0 %v1637
    %2147 = vmatpush.bf16.msra.mxu0 %v1636
    %2148 = vmatpush.bf16.msra.mxu0 %v1635
    %2149 = vmatpush.bf16.msra.mxu0 %v1634
    %2150 = vmatpush.bf16.msra.mxu0 %v1633
    %2151 = vmatpush.bf16.msra.mxu0 %v1632
    %2152 = vmatpush.bf16.msra.mxu0 %v1631
    %2153 = vmatpush.bf16.msra.mxu0 %v1630
    %2154 = vmatmul.bf16.gmra.mxu0 %v296
    %v2155 = vpop.f32.mrf.mxu0
    %v2156 = vadd.f32 %v2142, %v2155
    %v2157 = vpop.f32.mrf.mxu0
    %v2158 = vadd.f32 %v2144, %v2157
    %2159 = vdwg.mxu0
    %2160 = vmatpush.bf16.msra.mxu0 %v1645
    %2161 = vmatpush.bf16.msra.mxu0 %v1644
    %2162 = vmatpush.bf16.msra.mxu0 %v1643
    %2163 = vmatpush.bf16.msra.mxu0 %v1642
    %2164 = vmatpush.bf16.msra.mxu0 %v1641
    %2165 = vmatpush.bf16.msra.mxu0 %v1640
    %2166 = vmatpush.bf16.msra.mxu0 %v1639
    %2167 = vmatpush.bf16.msra.mxu0 %v1638
    %2168 = vmatmul.bf16.gmra.mxu0 %v297
    %v2169 = vpop.f32.mrf.mxu0
    %v2170 = vadd.f32 %v2156, %v2169
    %v2171 = vpop.f32.mrf.mxu0
    %v2172 = vadd.f32 %v2158, %v2171
    %2173 = vdwg.mxu0
    %v2174 = vmax.f32 %v2170, 0.0
    %v2175 = vmax.f32 %v2172, 0.0
    %v2176 = vpack.c.bf16 %v2175, %v2174
    %v2177 = vld [vmem:[%s3] sm:$0xf]
    %v2178 = vld [vmem:[%s3 + $0x4] sm:$0xf]
    %v2179 = vld [vmem:[%s3 + $0x8] sm:$0xf]
    %v2180 = vld [vmem:[%s3 + $0xc] sm:$0xf]
    %v2181 = vld [vmem:[%s3 + $0x10] sm:$0xf]
    %v2182 = vld [vmem:[%s3 + $0x14] sm:$0xf]
    %v2183 = vld [vmem:[%s3 + $0x18] sm:$0xf]
    %v2184 = vld [vmem:[%s3 + $0x1c] sm:$0xf]
    %v2185 = vld [vmem:[%s3 + $0x20] sm:$0xf]
    %v2186 = vld [vmem:[%s3 + $0x24] sm:$0xf]
    %v2187 = vld [vmem:[%s3 + $0x28] sm:$0xf]
    %v2188 = vld [vmem:[%s3 + $0x2c] sm:$0xf]
    %v2189 = vld [vmem:[%s3 + $0x30] sm:$0xf]
    %v2190 = vld [vmem:[%s3 + $0x34] sm:$0xf]
    %v2191 = vld [vmem:[%s3 + $0x38] sm:$0xf]
    %v2192 = vld [vmem:[%s3 + $0x3c] sm:$0xf]
    %v2193 = vld [vmem:[%s4] sm:$0x1]
    %v2195 = vperm.slane %v2193, 0
    %v2213 = vunpack.c.l.b16 %v2177
    %v2214 = vunpack.c.l.b16 %v2178
    %v2215 = vunpack.c.l.b16 %v2179
    %v2216 = vunpack.c.l.b16 %v2180
    %v2217 = vunpack.c.l.b16 %v2181
    %v2218 = vunpack.c.l.b16 %v2182
    %v2219 = vunpack.c.l.b16 %v2183
    %v2220 = vunpack.c.l.b16 %v2184
    %v2221 = vunpack.c.l.b16 %v2185
    %v2222 = vunpack.c.l.b16 %v2186
    %v2223 = vunpack.c.l.b16 %v2187
    %v2224 = vunpack.c.l.b16 %v2188
    %v2225 = vunpack.c.l.b16 %v2189
    %v2226 = vunpack.c.l.b16 %v2190
    %v2227 = vunpack.c.l.b16 %v2191
    %v2228 = vunpack.c.l.b16 %v2192
    %v2229 = vpack.c.b16 %v2214, %v2213
    %v2230 = vpack.c.b16 %v2216, %v2215
    %v2231 = vpack.c.b16 %v2218, %v2217
    %v2232 = vpack.c.b16 %v2220, %v2219
    %v2233 = vpack.c.b16 %v2222, %v2221
    %v2234 = vpack.c.b16 %v2224, %v2223
    %v2235 = vpack.c.b16 %v2226, %v2225
    %v2236 = vpack.c.b16 %v2228, %v2227
    %2245 = vmatpush.bf16.msra.mxu0 %v2236
    %2246 = vmatpush.bf16.msra.mxu0 %v2235
    %2247 = vmatpush.bf16.msra.mxu0 %v2234
    %2248 = vmatpush.bf16.msra.mxu0 %v2233
    %2249 = vmatpush.bf16.msra.mxu0 %v2232
    %2250 = vmatpush.bf16.msra.mxu0 %v2231
    %2251 = vmatpush.bf16.msra.mxu0 %v2230
    %2252 = vmatpush.bf16.msra.mxu0 %v2229
    %2253 = vmatmul.bf16.gmra.mxu0 %v2176
    %v2254 = vpop.f32.mrf.mxu0
    %v2255 = vadd.f32 %v2195, %v2254
    %v2256 = vpop.f32.mrf.mxu0
    %v2257 = vadd.f32 %v2195, %v2256
    %2258 = vdwg.mxu0
    %v2259 = vmax.f32 %v2255, 0.0
    %v2260 = vmax.f32 %v2257, 0.0
    %v2261 = vpack.c.bf16 %v2260, %v2259
    %2262 = vmatpush.bf16.msra.mxu0 %v2236
    %2263 = vmatpush.bf16.msra.mxu0 %v2235
    %2264 = vmatpush.bf16.msra.mxu0 %v2234
    %2265 = vmatpush.bf16.msra.mxu0 %v2233
    %2266 = vmatpush.bf16.msra.mxu0 %v2232
    %2267 = vmatpush.bf16.msra.mxu0 %v2231
    %2268 = vmatpush.bf16.msra.mxu0 %v2230
    %2269 = vmatpush.bf16.msra.mxu0 %v2229
    %2270 = vmatmul.bf16.gmra.mxu0 %v2261
    %v2271 = vpop.f32.mrf.mxu0
    %v2272 = vadd.f32 %v2195, %v2271
    %v2273 = vpop.f32.mrf.mxu0
    %v2274 = vadd.f32 %v2195, %v2273
    %2275 = vdwg.mxu0
    %v2276 = vmax.f32 %v2272, 0.0
    %v2277 = vmax.f32 %v2274, 0.0
    %v2278 = vpack.c.bf16 %v2277, %v2276
    %v2279 = vld [vmem:[%s5] sm:$0xf]
    %v2280 = vld [vmem:[%s5 + $0x4] sm:$0xf]
    %v2281 = vld [vmem:[%s5 + $0x8] sm:$0xf]
    %v2282 = vld [vmem:[%s5 + $0xc] sm:$0xf]
    %v2283 = vld [vmem:[%s5 + $0x10] sm:$0xf]
    %v2284 = vld [vmem:[%s5 + $0x14] sm:$0xf]
    %v2285 = vld [vmem:[%s5 + $0x18] sm:$0xf]
    %v2286 = vld [vmem:[%s5 + $0x1c] sm:$0xf]
    %v2287 = vld [vmem:[%s5 + $0x20] sm:$0xf]
    %v2288 = vld [vmem:[%s5 + $0x24] sm:$0xf]
    %v2289 = vld [vmem:[%s5 + $0x28] sm:$0xf]
    %v2290 = vld [vmem:[%s5 + $0x2c] sm:$0xf]
    %v2291 = vld [vmem:[%s5 + $0x30] sm:$0xf]
    %v2292 = vld [vmem:[%s5 + $0x34] sm:$0xf]
    %v2293 = vld [vmem:[%s5 + $0x38] sm:$0xf]
    %v2294 = vld [vmem:[%s5 + $0x3c] sm:$0xf]
    %v2295 = vld [vmem:[%s6] sm:$0x1]
    %v2297 = vperm.slane %v2295, 0
    %v2315 = vunpack.c.l.b16 %v2279
    %v2316 = vunpack.c.l.b16 %v2280
    %v2317 = vunpack.c.l.b16 %v2281
    %v2318 = vunpack.c.l.b16 %v2282
    %v2319 = vunpack.c.l.b16 %v2283
    %v2320 = vunpack.c.l.b16 %v2284
    %v2321 = vunpack.c.l.b16 %v2285
    %v2322 = vunpack.c.l.b16 %v2286
    %v2323 = vunpack.c.l.b16 %v2287
    %v2324 = vunpack.c.l.b16 %v2288
    %v2325 = vunpack.c.l.b16 %v2289
    %v2326 = vunpack.c.l.b16 %v2290
    %v2327 = vunpack.c.l.b16 %v2291
    %v2328 = vunpack.c.l.b16 %v2292
    %v2329 = vunpack.c.l.b16 %v2293
    %v2330 = vunpack.c.l.b16 %v2294
    %v2331 = vpack.c.b16 %v2316, %v2315
    %v2332 = vpack.c.b16 %v2318, %v2317
    %v2333 = vpack.c.b16 %v2320, %v2319
    %v2334 = vpack.c.b16 %v2322, %v2321
    %v2335 = vpack.c.b16 %v2324, %v2323
    %v2336 = vpack.c.b16 %v2326, %v2325
    %v2337 = vpack.c.b16 %v2328, %v2327
    %v2338 = vpack.c.b16 %v2330, %v2329
    %2347 = vmatpush.bf16.msra.mxu0 %v2338
    %2348 = vmatpush.bf16.msra.mxu0 %v2337
    %2349 = vmatpush.bf16.msra.mxu0 %v2336
    %2350 = vmatpush.bf16.msra.mxu0 %v2335
    %2351 = vmatpush.bf16.msra.mxu0 %v2334
    %2352 = vmatpush.bf16.msra.mxu0 %v2333
    %2353 = vmatpush.bf16.msra.mxu0 %v2332
    %2354 = vmatpush.bf16.msra.mxu0 %v2331
    %2355 = vmatmul.bf16.gmra.mxu0 %v2278
    %v2356 = vpop.f32.mrf.mxu0
    %v2357 = vadd.f32 %v2297, %v2356
    %v2358 = vpop.f32.mrf.mxu0
    %v2359 = vadd.f32 %v2297, %v2358
    %2360 = vdwg.mxu0
    %2361 = vst [vmem:[#allocation2] sm:$0xff] %v2357
    %2362 = vst [vmem:[#allocation2 + $0x8] sm:$0xff] %v2359
    // Predicated region
    $region30: #{linear_classifier_forward.1} parent=1 // pred_check
      _
    $region31: #{linear_classifier_forward.1} parent=1 // pred_check_branch
      %2364 = sbr.rel (0) target = $region33
    $region32: #{linear_classifier_forward.1} parent=1 // pred_region
      %2366 = vsyncadd [#allocation3], 224
      %s2367 = sshll.u32 [#allocation2], 4
      %s2368 = int_to_ptr.vmem [resolvable:$true] %s2367
      %s2369 = sshll.u32 %s7, 4
      %s2370 = int_to_ptr.hbm [resolvable:$true] %s2369
      %2375 = dma.vmem_to_hbm [thread:$0]  %s2368, 32, %s2370, [#allocation3], 32, 32, 2
    $region33: #{linear_classifier_forward.1} parent=1 // pred_fallthru
      _
    // Predicated region
    $region34: #{linear_classifier_forward.1} parent=1 // pred_check
      _
    $region35: #{linear_classifier_forward.1} parent=1 // pred_check_branch
      %2377 = sbr.rel (0) target = $region37
    $region36: #{linear_classifier_forward.1} parent=1 // pred_region
      %2379 = dma.done [#allocation3], 256
    $region37: #{linear_classifier_forward.1} parent=1 // pred_fallthru
      _
    %2380 = vsyncpa [#allocation3], 1

</llo_original>
